<compile_context>
chip_gen: v7x
topology: tpu7x:2x2x1
jax: 0.10.0
libtpu: 0.0.40
codegen_flags: <defaults>
</compile_context>

<pallas_src>
import functools
import math

import jax
import jax.numpy as jnp
from jax.experimental import pallas as pl
from jax.experimental.pallas import tpu as pltpu


# ------------------------------ kernel helpers ------------------------------

def _gelu_tanh(x):
    # tanh-approx GELU (EUP tanh instead of a long erf VALU polynomial).
    c = math.sqrt(2.0 / math.pi)
    return 0.5 * x * (1.0 + jnp.tanh(c * (x + 0.044715 * x * x * x)))


def _layernorm(x, g, b, eps):
    mean = jnp.mean(x, axis=-1, keepdims=True)
    var = jnp.mean(jnp.square(x - mean), axis=-1, keepdims=True)
    return (x - mean) * jax.lax.rsqrt(var + eps) * g + b


def _prow(p_ref, r, n):
    # One f32 parameter row (full 128-lane load, then a static value lane-slice).
    return p_ref[r:r + 1, :][:, :n]


# ------------------------------ fused Pallas kernel ------------------------------
#
# Weight slab (bf16, 128 lanes, zero-padded columns), row layout:
#   per layer l (stride WL = 3*H + I):
#     +0      : fused QKV weight   [H rows,  3*H cols]  (Q | K | V, heads contiguous)
#     +H      : output projection  [H rows,  H cols]
#     +2H     : FFN w1             [H rows,  I cols]
#     +3H     : FFN w2             [I rows,  H cols]
#   after layers (WB = L*WL):
#     +0      : LM-head dense      [H rows,  H cols]
#     +H      : tied decoder       [H rows,  V cols]
#
# Param slab (f32, 128 lanes, zero-padded), row layout:
#   0: emb LN gamma   1: emb LN beta
#   per layer l (base 2 + 8*l):
#     +0 fused QKV bias (3*H)  +1 o_b (H)  +2 attn LN g  +3 attn LN b
#     +4 ffn b1 (I)            +5 ffn b2   +6 ffn LN g   +7 ffn LN b
#   tail (base 2 + 8*L): +0 lm dense b   +1 lm LN g   +2 lm LN b   +3 dec bias (V)

def _fused_roberta_kernel(x_ref,      # [T, H]  f32   summed embeddings (pre-LN)
                          bias_ref,   # [T, T]  f32   block-diagonal additive attn mask
                          w_ref,      # [Wrows, 128] bf16  weight slab
                          p_ref,      # [Prows, 128] f32   bias / LN slab
                          out_ref,    # [T, V]  f32   logits
                          *, nH, dH, H, I, L, eps):
    bf16 = jnp.bfloat16
    scale = 1.0 / math.sqrt(dH)
    WL = 3 * H + I

    attn_bias = bias_ref[...]                                           # [T, T]

    # ---- embedding LayerNorm ----
    x = _layernorm(x_ref[...], _prow(p_ref, 0, H), _prow(p_ref, 1, H), eps)

    for l in range(L):                                                  # static unroll
        wbase = l * WL
        pbase = 2 + 8 * l

        # ---- fused QKV projection (one matmul for all heads) ----
        x_bf = x.astype(bf16)                                           # cast once
        qkv = jnp.dot(x_bf, w_ref[wbase:wbase + H, :],
                      preferred_element_type=jnp.float32)               # [T, 128]
        qkv = qkv + p_ref[pbase:pbase + 1, :]                           # fused qkv bias

        # ---- attention, batched over B via block-diagonal mask ----
        ctx_heads = []
        for h in range(nH):                                             # static unroll
            qh = qkv[:, h * dH:(h + 1) * dH].astype(bf16)
            kh = qkv[:, H + h * dH:H + (h + 1) * dH].astype(bf16)
            vh = qkv[:, 2 * H + h * dH:2 * H + (h + 1) * dH].astype(bf16)

            s = jnp.dot(qh, kh.T, preferred_element_type=jnp.float32) * scale
            s = s + attn_bias
            s = s - jnp.max(s, axis=-1, keepdims=True)
            p = jnp.exp(s)
            p = p * pl.reciprocal(jnp.sum(p, axis=-1, keepdims=True), approx=True)
            ctx_heads.append(jnp.dot(p.astype(bf16), vh,
                                     preferred_element_type=jnp.float32))
        ctx = jnp.concatenate(ctx_heads, axis=-1).astype(bf16)          # [T, H] (lanes)

        # ---- output projection (single matmul) + residual + LN ----
        attn = jnp.dot(ctx, w_ref[wbase + H:wbase + 2 * H, :],
                       preferred_element_type=jnp.float32)[:, :H]
        attn = attn + _prow(p_ref, pbase + 1, H)
        x = _layernorm(attn + x, _prow(p_ref, pbase + 2, H),
                       _prow(p_ref, pbase + 3, H), eps)

        # ---- feed forward ----
        x_bf = x.astype(bf16)
        h1 = jnp.dot(x_bf, w_ref[wbase + 2 * H:wbase + 3 * H, :],
                     preferred_element_type=jnp.float32)[:, :I]
        h1 = _gelu_tanh(h1 + _prow(p_ref, pbase + 4, I))
        h2 = jnp.dot(h1.astype(bf16), w_ref[wbase + 3 * H:wbase + 3 * H + I, :],
                     preferred_element_type=jnp.float32)[:, :H]
        h2 = h2 + _prow(p_ref, pbase + 5, H)
        x = _layernorm(h2 + x, _prow(p_ref, pbase + 6, H),
                       _prow(p_ref, pbase + 7, H), eps)

    # ---- LM head: dense -> gelu -> LayerNorm -> tied decoder (+ bias) ----
    WB = L * WL
    PB = 2 + 8 * L
    y = jnp.dot(x.astype(bf16), w_ref[WB:WB + H, :],
                preferred_element_type=jnp.float32)[:, :H]
    y = _gelu_tanh(y + _prow(p_ref, PB, H))
    y = _layernorm(y, _prow(p_ref, PB + 1, H), _prow(p_ref, PB + 2, H), eps)
    logits = jnp.dot(y.astype(bf16), w_ref[WB + H:WB + 2 * H, :],
                     preferred_element_type=jnp.float32)                # [T, V=128]
    out_ref[...] = (logits + p_ref[PB + 3:PB + 4, :]).astype(out_ref.dtype)


# ------------------------------- model definition --------------------------------

class Config:
    vocab_size = 128
    hidden = 32
    heads = 2
    head_dim = 16
    intermediate = 64
    layers = 2
    max_pos = 34          # seq + padding_idx + headroom
    type_vocab = 1
    pad_idx = 1


def init_params(key, cfg):
    std = 0.02
    ks = iter(jax.random.split(key, 256))

    def w(shape):
        return (std * jax.random.normal(next(ks), shape)).astype(jnp.float32)

    p = {
        "word_emb": w((cfg.vocab_size, cfg.hidden)),
        "pos_emb": w((cfg.max_pos, cfg.hidden)),
        "type_emb": w((cfg.type_vocab, cfg.hidden)),
        "emb_ln_g": jnp.ones((cfg.hidden,), jnp.float32),
        "emb_ln_b": jnp.zeros((cfg.hidden,), jnp.float32),
        "layers": [],
        # LM head (decoder weight tied to word_emb, only a bias here)
        "lm_dense_w": w((cfg.hidden, cfg.hidden)),
        "lm_dense_b": jnp.zeros((cfg.hidden,), jnp.float32),
        "lm_ln_g": jnp.ones((cfg.hidden,), jnp.float32),
        "lm_ln_b": jnp.zeros((cfg.hidden,), jnp.float32),
        "lm_dec_b": jnp.zeros((cfg.vocab_size,), jnp.float32),
    }
    for _ in range(cfg.layers):
        p["layers"].append({
            "q_w": w((cfg.hidden, cfg.hidden)), "q_b": jnp.zeros((cfg.hidden,), jnp.float32),
            "k_w": w((cfg.hidden, cfg.hidden)), "k_b": jnp.zeros((cfg.hidden,), jnp.float32),
            "v_w": w((cfg.hidden, cfg.hidden)), "v_b": jnp.zeros((cfg.hidden,), jnp.float32),
            "o_w": w((cfg.hidden, cfg.hidden)), "o_b": jnp.zeros((cfg.hidden,), jnp.float32),
            "attn_ln_g": jnp.ones((cfg.hidden,), jnp.float32),
            "attn_ln_b": jnp.zeros((cfg.hidden,), jnp.float32),
            "ffn_w1": w((cfg.hidden, cfg.intermediate)),
            "ffn_b1": jnp.zeros((cfg.intermediate,), jnp.float32),
            "ffn_w2": w((cfg.intermediate, cfg.hidden)),
            "ffn_b2": jnp.zeros((cfg.hidden,), jnp.float32),
            "ffn_ln_g": jnp.ones((cfg.hidden,), jnp.float32),
            "ffn_ln_b": jnp.zeros((cfg.hidden,), jnp.float32),
        })
    return p


def pack_params(params, cfg):
    """Pack all weights into two lane-dense slabs: bf16 weights + f32 biases/LN."""
    H, I, V, L = cfg.hidden, cfg.intermediate, cfg.vocab_size, cfg.layers
    LANES = 128

    def pad_w(mat):          # -> bf16, [rows, 128]
        mat = jnp.asarray(mat, jnp.float32)
        return jnp.pad(mat, ((0, 0), (0, LANES - mat.shape[1]))).astype(jnp.bfloat16)

    def row(vec):            # -> f32,  [1, 128]
        vec = jnp.asarray(vec, jnp.float32).reshape(1, -1)
        return jnp.pad(vec, ((0, 0), (0, LANES - vec.shape[1])))

    w_rows, p_rows = [], []
    p_rows += [row(params["emb_ln_g"]), row(params["emb_ln_b"])]

    for lp in params["layers"]:
        qkv_w = jnp.concatenate([lp["q_w"], lp["k_w"], lp["v_w"]], axis=1)   # [H, 3H]
        qkv_b = jnp.concatenate([lp["q_b"], lp["k_b"], lp["v_b"]], axis=0)   # [3H]
        w_rows += [pad_w(qkv_w), pad_w(lp["o_w"]), pad_w(lp["ffn_w1"]), pad_w(lp["ffn_w2"])]
        p_rows += [row(qkv_b), row(lp["o_b"]),
                   row(lp["attn_ln_g"]), row(lp["attn_ln_b"]),
                   row(lp["ffn_b1"]), row(lp["ffn_b2"]),
                   row(lp["ffn_ln_g"]), row(lp["ffn_ln_b"])]

    # LM head; decoder tied to the input word embedding (HF RobertaForMaskedLM).
    w_rows += [pad_w(params["lm_dense_w"]), pad_w(params["word_emb"].T)]     # [H,H],[H,V]
    p_rows += [row(params["lm_dense_b"]), row(params["lm_ln_g"]),
               row(params["lm_ln_b"]), row(params["lm_dec_b"])]

    return {"w_slab": jnp.concatenate(w_rows, axis=0),    # [L*(3H+I)+2H, 128] bf16
            "p_slab": jnp.concatenate(p_rows, axis=0)}    # [2+8L+4, 128]      f32


def roberta_forward_pallas(params, packed, input_ids, attention_mask, cfg):
    """Equivalent of RobertaForMaskedLM(input_ids, attention_mask).logits"""
    B, S = input_ids.shape
    T, H, V = B * S, cfg.hidden, cfg.vocab_size

    # --- embeddings: data-dependent gathers stay in XLA, everything else in Pallas ---
    pad_mask = (input_ids != cfg.pad_idx).astype(jnp.int32)
    position_ids = jnp.cumsum(pad_mask, axis=1) * pad_mask + cfg.pad_idx      # HF formula
    h = (params["word_emb"][input_ids]
         + params["pos_emb"][position_ids]
         + params["type_emb"][0][None, None, :])
    x_emb = h.reshape(T, H).astype(jnp.float32)

    # Block-diagonal additive attention bias over flattened tokens: -1e9 across
    # batches or onto padded keys, 0 elsewhere.  [T, T]
    tok_batch = jnp.repeat(jnp.arange(B), S)
    same_batch = tok_batch[:, None] == tok_batch[None, :]
    key_valid = attention_mask.reshape(T) > 0
    attn_bias = jnp.where(same_batch & key_valid[None, :], 0.0, -1e9).astype(jnp.float32)

    kernel = functools.partial(_fused_roberta_kernel, nH=cfg.heads, dH=cfg.head_dim,
                               H=H, I=cfg.intermediate, L=cfg.layers, eps=1e-5)
    vmem = pl.BlockSpec(memory_space=pltpu.MemorySpace.VMEM)

    # TODO(synk): at real RoBERTa sizes (H=768, S=512, vocab~50k) the whole-model-in-VMEM
    # layout no longer fits (the tied decoder alone is ~77 MiB bf16, over v7x's 64 MiB);
    # replace with a tiled pipeline (token-block 'parallel' grid axis for the 2 v7x cores,
    # vocab tiled over lane-dense N blocks, per-layer weights streamed via BlockSpec).
    logits = pl.pallas_call(
        kernel,
        out_shape=jax.ShapeDtypeStruct((T, V), jnp.float32),
        in_specs=[vmem, vmem, vmem, vmem],
        out_specs=vmem,       # [tokens, 128] -> lane-dense output slab
    )(x_emb, attn_bias, packed["w_slab"], packed["p_slab"])
    return logits.reshape(B, S, V)


# ------------------------------------ driver --------------------------------------

if __name__ == "__main__":
    cfg = Config()
    B, S = 2, 8

    key = jax.random.PRNGKey(0)
    k_param, k_ids = jax.random.split(key)

    params = init_params(k_param, cfg)
    packed = pack_params(params, cfg)

    input_ids = jax.random.randint(k_ids, (B, S), 0, cfg.vocab_size, dtype=jnp.int32)
    attention_mask = jnp.ones((B, S), dtype=jnp.int32)

    @jax.jit
    def fwd(ids, attn_mask):
        return roberta_forward_pallas(params, packed, ids, attn_mask, cfg)

    logits = fwd(input_ids, attention_mask)
    jax.block_until_ready(logits)

    assert logits.shape == (B, S, cfg.vocab_size)
    assert bool(jnp.all(jnp.isfinite(logits)))
    print("KERNEL_OK")
</pallas_src>

<mosaic_0001>
module attributes {stable_mosaic.version = 11 : i64} {
  func.func @_fused_roberta_kernel(%arg0: memref<16x32xf32, #tpu.memory_space<vmem>>, %arg1: memref<16x16xf32, #tpu.memory_space<vmem>>, %arg2: memref<384x128xbf16, #tpu.memory_space<vmem>>, %arg3: memref<22x128xf32, #tpu.memory_space<vmem>>, %arg4: memref<16x128xf32, #tpu.memory_space<vmem>>) attributes {dimension_semantics = [], scalar_prefetch = 0 : i64, scratch_operands = 0 : i64, tpu.core_type = #tpu.core_type<tc>} {
    %c0 = arith.constant 0 : index
    %c0_0 = arith.constant 0 : index
    %0 = vector.load %arg1[%c0, %c0_0] : memref<16x16xf32, #tpu.memory_space<vmem>>, vector<16x16xf32>
    %c0_1 = arith.constant 0 : index
    %c0_2 = arith.constant 0 : index
    %1 = vector.load %arg0[%c0_1, %c0_2] : memref<16x32xf32, #tpu.memory_space<vmem>>, vector<16x32xf32>
    %c0_3 = arith.constant 0 : index
    %c0_4 = arith.constant 0 : index
    %2 = vector.load %arg3[%c0_3, %c0_4] : memref<22x128xf32, #tpu.memory_space<vmem>>, vector<1x128xf32>
    %3 = vector.extract_strided_slice %2 {offsets = [0, 0], sizes = [1, 32], strides = [1, 1]} : vector<1x128xf32> to vector<1x32xf32>
    %c1 = arith.constant 1 : index
    %c0_5 = arith.constant 0 : index
    %4 = vector.load %arg3[%c1, %c0_5] : memref<22x128xf32, #tpu.memory_space<vmem>>, vector<1x128xf32>
    %5 = vector.extract_strided_slice %4 {offsets = [0, 0], sizes = [1, 32], strides = [1, 1]} : vector<1x128xf32> to vector<1x32xf32>
    %cst = arith.constant dense<0.000000e+00> : vector<16xf32>
    %6 = vector.multi_reduction <add>, %1, %cst [1] : vector<16x32xf32> to vector<16xf32>
    %7 = vector.shape_cast %6 : vector<16xf32> to vector<16x1xf32>
    %cst_6 = arith.constant 3.200000e+01 : f32
    %8 = vector.broadcast %cst_6 : f32 to vector<16x1xf32>
    %9 = arith.divf %7, %8 : vector<16x1xf32>
    %10 = vector.broadcast %9 : vector<16x1xf32> to vector<16x32xf32>
    %11 = arith.subf %1, %10 : vector<16x32xf32>
    %12 = arith.mulf %11, %11 : vector<16x32xf32>
    %cst_7 = arith.constant dense<0.000000e+00> : vector<16xf32>
    %13 = vector.multi_reduction <add>, %12, %cst_7 [1] : vector<16x32xf32> to vector<16xf32>
    %14 = vector.shape_cast %13 : vector<16xf32> to vector<16x1xf32>
    %cst_8 = arith.constant 3.200000e+01 : f32
    %15 = vector.broadcast %cst_8 : f32 to vector<16x1xf32>
    %16 = arith.divf %14, %15 : vector<16x1xf32>
    %17 = vector.broadcast %9 : vector<16x1xf32> to vector<16x32xf32>
    %18 = arith.subf %1, %17 : vector<16x32xf32>
    %cst_9 = arith.constant 9.99999974E-6 : f32
    %19 = vector.broadcast %cst_9 : f32 to vector<16x1xf32>
    %20 = arith.addf %16, %19 : vector<16x1xf32>
    %21 = math.rsqrt %20 : vector<16x1xf32>
    %22 = vector.broadcast %21 : vector<16x1xf32> to vector<16x32xf32>
    %23 = arith.mulf %18, %22 : vector<16x32xf32>
    %24 = vector.broadcast %3 : vector<1x32xf32> to vector<16x32xf32>
    %25 = arith.mulf %23, %24 : vector<16x32xf32>
    %26 = vector.broadcast %5 : vector<1x32xf32> to vector<16x32xf32>
    %27 = arith.addf %25, %26 : vector<16x32xf32>
    %28 = arith.truncf %27 : vector<16x32xf32> to vector<16x32xbf16>
    %c0_10 = arith.constant 0 : index
    %c0_11 = arith.constant 0 : index
    %29 = vector.load %arg2[%c0_10, %c0_11] : memref<384x128xbf16, #tpu.memory_space<vmem>>, vector<32x128xbf16>
    %cst_12 = arith.constant dense<0.000000e+00> : vector<16x128xf32>
    %30 = tpu.matmul %28, %29, %cst_12 {dimension_numbers = #tpu.dot_dimension_numbers<[1], [0], [0], [1], [0, 0, 1, 1], [], []>} : vector<16x32xbf16>, vector<32x128xbf16>, vector<16x128xf32> -> vector<16x128xf32>
    %c2 = arith.constant 2 : index
    %c0_13 = arith.constant 0 : index
    %31 = vector.load %arg3[%c2, %c0_13] : memref<22x128xf32, #tpu.memory_space<vmem>>, vector<1x128xf32>
    %32 = vector.broadcast %31 : vector<1x128xf32> to vector<16x128xf32>
    %33 = arith.addf %30, %32 : vector<16x128xf32>
    %34 = vector.extract_strided_slice %33 {offsets = [0, 0], sizes = [16, 16], strides = [1, 1]} : vector<16x128xf32> to vector<16x16xf32>
    %35 = arith.truncf %34 : vector<16x16xf32> to vector<16x16xbf16>
    %36 = vector.extract_strided_slice %33 {offsets = [0, 32], sizes = [16, 16], strides = [1, 1]} : vector<16x128xf32> to vector<16x16xf32>
    %37 = arith.truncf %36 : vector<16x16xf32> to vector<16x16xbf16>
    %38 = vector.extract_strided_slice %33 {offsets = [0, 64], sizes = [16, 16], strides = [1, 1]} : vector<16x128xf32> to vector<16x16xf32>
    %39 = arith.truncf %38 : vector<16x16xf32> to vector<16x16xbf16>
    %40 = tpu.transpose %37, [1, 0] : vector<16x16xbf16> -> vector<16x16xbf16>
    %cst_14 = arith.constant dense<0.000000e+00> : vector<16x16xf32>
    %41 = tpu.matmul %35, %40, %cst_14 {dimension_numbers = #tpu.dot_dimension_numbers<[1], [0], [0], [1], [0, 0, 1, 1], [], []>} : vector<16x16xbf16>, vector<16x16xbf16>, vector<16x16xf32> -> vector<16x16xf32>
    %cst_15 = arith.constant 2.500000e-01 : f32
    %42 = vector.broadcast %cst_15 : f32 to vector<16x16xf32>
    %43 = arith.mulf %41, %42 : vector<16x16xf32>
    %44 = arith.addf %43, %0 : vector<16x16xf32>
    %cst_16 = arith.constant dense<0xFF800000> : vector<16xf32>
    %45 = vector.multi_reduction <maximumf>, %44, %cst_16 [1] : vector<16x16xf32> to vector<16xf32>
    %46 = vector.shape_cast %45 : vector<16xf32> to vector<16x1xf32>
    %47 = vector.broadcast %46 : vector<16x1xf32> to vector<16x16xf32>
    %48 = arith.subf %44, %47 : vector<16x16xf32>
    %49 = math.exp %48 : vector<16x16xf32>
    %cst_17 = arith.constant dense<0.000000e+00> : vector<16xf32>
    %50 = vector.multi_reduction <add>, %49, %cst_17 [1] : vector<16x16xf32> to vector<16xf32>
    %51 = vector.shape_cast %50 : vector<16xf32> to vector<16x1xf32>
    %52 = tpu.reciprocal %51 {approx = true} : vector<16x1xf32> -> vector<16x1xf32>
    %53 = vector.broadcast %52 : vector<16x1xf32> to vector<16x16xf32>
    %54 = arith.mulf %49, %53 : vector<16x16xf32>
    %55 = arith.truncf %54 : vector<16x16xf32> to vector<16x16xbf16>
    %cst_18 = arith.constant dense<0.000000e+00> : vector<16x16xf32>
    %56 = tpu.matmul %55, %39, %cst_18 {dimension_numbers = #tpu.dot_dimension_numbers<[1], [0], [0], [1], [0, 0, 1, 1], [], []>} : vector<16x16xbf16>, vector<16x16xbf16>, vector<16x16xf32> -> vector<16x16xf32>
    %57 = vector.extract_strided_slice %33 {offsets = [0, 16], sizes = [16, 16], strides = [1, 1]} : vector<16x128xf32> to vector<16x16xf32>
    %58 = arith.truncf %57 : vector<16x16xf32> to vector<16x16xbf16>
    %59 = vector.extract_strided_slice %33 {offsets = [0, 48], sizes = [16, 16], strides = [1, 1]} : vector<16x128xf32> to vector<16x16xf32>
    %60 = arith.truncf %59 : vector<16x16xf32> to vector<16x16xbf16>
    %61 = vector.extract_strided_slice %33 {offsets = [0, 80], sizes = [16, 16], strides = [1, 1]} : vector<16x128xf32> to vector<16x16xf32>
    %62 = arith.truncf %61 : vector<16x16xf32> to vector<16x16xbf16>
    %63 = tpu.transpose %60, [1, 0] : vector<16x16xbf16> -> vector<16x16xbf16>
    %cst_19 = arith.constant dense<0.000000e+00> : vector<16x16xf32>
    %64 = tpu.matmul %58, %63, %cst_19 {dimension_numbers = #tpu.dot_dimension_numbers<[1], [0], [0], [1], [0, 0, 1, 1], [], []>} : vector<16x16xbf16>, vector<16x16xbf16>, vector<16x16xf32> -> vector<16x16xf32>
    %cst_20 = arith.constant 2.500000e-01 : f32
    %65 = vector.broadcast %cst_20 : f32 to vector<16x16xf32>
    %66 = arith.mulf %64, %65 : vector<16x16xf32>
    %67 = arith.addf %66, %0 : vector<16x16xf32>
    %cst_21 = arith.constant dense<0xFF800000> : vector<16xf32>
    %68 = vector.multi_reduction <maximumf>, %67, %cst_21 [1] : vector<16x16xf32> to vector<16xf32>
    %69 = vector.shape_cast %68 : vector<16xf32> to vector<16x1xf32>
    %70 = vector.broadcast %69 : vector<16x1xf32> to vector<16x16xf32>
    %71 = arith.subf %67, %70 : vector<16x16xf32>
    %72 = math.exp %71 : vector<16x16xf32>
    %cst_22 = arith.constant dense<0.000000e+00> : vector<16xf32>
    %73 = vector.multi_reduction <add>, %72, %cst_22 [1] : vector<16x16xf32> to vector<16xf32>
    %74 = vector.shape_cast %73 : vector<16xf32> to vector<16x1xf32>
    %75 = tpu.reciprocal %74 {approx = true} : vector<16x1xf32> -> vector<16x1xf32>
    %76 = vector.broadcast %75 : vector<16x1xf32> to vector<16x16xf32>
    %77 = arith.mulf %72, %76 : vector<16x16xf32>
    %78 = arith.truncf %77 : vector<16x16xf32> to vector<16x16xbf16>
    %cst_23 = arith.constant dense<0.000000e+00> : vector<16x16xf32>
    %79 = tpu.matmul %78, %62, %cst_23 {dimension_numbers = #tpu.dot_dimension_numbers<[1], [0], [0], [1], [0, 0, 1, 1], [], []>} : vector<16x16xbf16>, vector<16x16xbf16>, vector<16x16xf32> -> vector<16x16xf32>
    %80 = tpu.concatenate %56, %79 in 1 : vector<16x16xf32>, vector<16x16xf32> -> vector<16x32xf32>
    %81 = arith.truncf %80 : vector<16x32xf32> to vector<16x32xbf16>
    %c32 = arith.constant 32 : index
    %c0_24 = arith.constant 0 : index
    %82 = vector.load %arg2[%c32, %c0_24] : memref<384x128xbf16, #tpu.memory_space<vmem>>, vector<32x128xbf16>
    %cst_25 = arith.constant dense<0.000000e+00> : vector<16x128xf32>
    %83 = tpu.matmul %81, %82, %cst_25 {dimension_numbers = #tpu.dot_dimension_numbers<[1], [0], [0], [1], [0, 0, 1, 1], [], []>} : vector<16x32xbf16>, vector<32x128xbf16>, vector<16x128xf32> -> vector<16x128xf32>
    %84 = vector.extract_strided_slice %83 {offsets = [0, 0], sizes = [16, 32], strides = [1, 1]} : vector<16x128xf32> to vector<16x32xf32>
    %c3 = arith.constant 3 : index
    %c0_26 = arith.constant 0 : index
    %85 = vector.load %arg3[%c3, %c0_26] : memref<22x128xf32, #tpu.memory_space<vmem>>, vector<1x128xf32>
    %86 = vector.extract_strided_slice %85 {offsets = [0, 0], sizes = [1, 32], strides = [1, 1]} : vector<1x128xf32> to vector<1x32xf32>
    %87 = vector.broadcast %86 : vector<1x32xf32> to vector<16x32xf32>
    %88 = arith.addf %84, %87 : vector<16x32xf32>
    %89 = arith.addf %88, %27 : vector<16x32xf32>
    %c4 = arith.constant 4 : index
    %c0_27 = arith.constant 0 : index
    %90 = vector.load %arg3[%c4, %c0_27] : memref<22x128xf32, #tpu.memory_space<vmem>>, vector<1x128xf32>
    %91 = vector.extract_strided_slice %90 {offsets = [0, 0], sizes = [1, 32], strides = [1, 1]} : vector<1x128xf32> to vector<1x32xf32>
    %c5 = arith.constant 5 : index
    %c0_28 = arith.constant 0 : index
    %92 = vector.load %arg3[%c5, %c0_28] : memref<22x128xf32, #tpu.memory_space<vmem>>, vector<1x128xf32>
    %93 = vector.extract_strided_slice %92 {offsets = [0, 0], sizes = [1, 32], strides = [1, 1]} : vector<1x128xf32> to vector<1x32xf32>
    %cst_29 = arith.constant dense<0.000000e+00> : vector<16xf32>
    %94 = vector.multi_reduction <add>, %89, %cst_29 [1] : vector<16x32xf32> to vector<16xf32>
    %95 = vector.shape_cast %94 : vector<16xf32> to vector<16x1xf32>
    %cst_30 = arith.constant 3.200000e+01 : f32
    %96 = vector.broadcast %cst_30 : f32 to vector<16x1xf32>
    %97 = arith.divf %95, %96 : vector<16x1xf32>
    %98 = vector.broadcast %97 : vector<16x1xf32> to vector<16x32xf32>
    %99 = arith.subf %89, %98 : vector<16x32xf32>
    %100 = arith.mulf %99, %99 : vector<16x32xf32>
    %cst_31 = arith.constant dense<0.000000e+00> : vector<16xf32>
    %101 = vector.multi_reduction <add>, %100, %cst_31 [1] : vector<16x32xf32> to vector<16xf32>
    %102 = vector.shape_cast %101 : vector<16xf32> to vector<16x1xf32>
    %cst_32 = arith.constant 3.200000e+01 : f32
    %103 = vector.broadcast %cst_32 : f32 to vector<16x1xf32>
    %104 = arith.divf %102, %103 : vector<16x1xf32>
    %105 = vector.broadcast %97 : vector<16x1xf32> to vector<16x32xf32>
    %106 = arith.subf %89, %105 : vector<16x32xf32>
    %cst_33 = arith.constant 9.99999974E-6 : f32
    %107 = vector.broadcast %cst_33 : f32 to vector<16x1xf32>
    %108 = arith.addf %104, %107 : vector<16x1xf32>
    %109 = math.rsqrt %108 : vector<16x1xf32>
    %110 = vector.broadcast %109 : vector<16x1xf32> to vector<16x32xf32>
    %111 = arith.mulf %106, %110 : vector<16x32xf32>
    %112 = vector.broadcast %91 : vector<1x32xf32> to vector<16x32xf32>
    %113 = arith.mulf %111, %112 : vector<16x32xf32>
    %114 = vector.broadcast %93 : vector<1x32xf32> to vector<16x32xf32>
    %115 = arith.addf %113, %114 : vector<16x32xf32>
    %116 = arith.truncf %115 : vector<16x32xf32> to vector<16x32xbf16>
    %c64 = arith.constant 64 : index
    %c0_34 = arith.constant 0 : index
    %117 = vector.load %arg2[%c64, %c0_34] : memref<384x128xbf16, #tpu.memory_space<vmem>>, vector<32x128xbf16>
    %cst_35 = arith.constant dense<0.000000e+00> : vector<16x128xf32>
    %118 = tpu.matmul %116, %117, %cst_35 {dimension_numbers = #tpu.dot_dimension_numbers<[1], [0], [0], [1], [0, 0, 1, 1], [], []>} : vector<16x32xbf16>, vector<32x128xbf16>, vector<16x128xf32> -> vector<16x128xf32>
    %119 = vector.extract_strided_slice %118 {offsets = [0, 0], sizes = [16, 64], strides = [1, 1]} : vector<16x128xf32> to vector<16x64xf32>
    %c6 = arith.constant 6 : index
    %c0_36 = arith.constant 0 : index
    %120 = vector.load %arg3[%c6, %c0_36] : memref<22x128xf32, #tpu.memory_space<vmem>>, vector<1x128xf32>
    %121 = vector.extract_strided_slice %120 {offsets = [0, 0], sizes = [1, 64], strides = [1, 1]} : vector<1x128xf32> to vector<1x64xf32>
    %122 = vector.broadcast %121 : vector<1x64xf32> to vector<16x64xf32>
    %123 = arith.addf %119, %122 : vector<16x64xf32>
    %cst_37 = arith.constant 5.000000e-01 : f32
    %124 = vector.broadcast %cst_37 : f32 to vector<16x64xf32>
    %125 = arith.mulf %124, %123 : vector<16x64xf32>
    %cst_38 = arith.constant 4.471500e-02 : f32
    %126 = vector.broadcast %cst_38 : f32 to vector<16x64xf32>
    %127 = arith.mulf %126, %123 : vector<16x64xf32>
    %128 = arith.mulf %127, %123 : vector<16x64xf32>
    %129 = arith.mulf %128, %123 : vector<16x64xf32>
    %130 = arith.addf %123, %129 : vector<16x64xf32>
    %cst_39 = arith.constant 0.797884583 : f32
    %131 = vector.broadcast %cst_39 : f32 to vector<16x64xf32>
    %132 = arith.mulf %131, %130 : vector<16x64xf32>
    %133 = math.tanh %132 : vector<16x64xf32>
    %cst_40 = arith.constant 1.000000e+00 : f32
    %134 = vector.broadcast %cst_40 : f32 to vector<16x64xf32>
    %135 = arith.addf %134, %133 : vector<16x64xf32>
    %136 = arith.mulf %125, %135 : vector<16x64xf32>
    %137 = arith.truncf %136 : vector<16x64xf32> to vector<16x64xbf16>
    %c96 = arith.constant 96 : index
    %c0_41 = arith.constant 0 : index
    %138 = vector.load %arg2[%c96, %c0_41] : memref<384x128xbf16, #tpu.memory_space<vmem>>, vector<64x128xbf16>
    %cst_42 = arith.constant dense<0.000000e+00> : vector<16x128xf32>
    %139 = tpu.matmul %137, %138, %cst_42 {dimension_numbers = #tpu.dot_dimension_numbers<[1], [0], [0], [1], [0, 0, 1, 1], [], []>} : vector<16x64xbf16>, vector<64x128xbf16>, vector<16x128xf32> -> vector<16x128xf32>
    %140 = vector.extract_strided_slice %139 {offsets = [0, 0], sizes = [16, 32], strides = [1, 1]} : vector<16x128xf32> to vector<16x32xf32>
    %c7 = arith.constant 7 : index
    %c0_43 = arith.constant 0 : index
    %141 = vector.load %arg3[%c7, %c0_43] : memref<22x128xf32, #tpu.memory_space<vmem>>, vector<1x128xf32>
    %142 = vector.extract_strided_slice %141 {offsets = [0, 0], sizes = [1, 32], strides = [1, 1]} : vector<1x128xf32> to vector<1x32xf32>
    %143 = vector.broadcast %142 : vector<1x32xf32> to vector<16x32xf32>
    %144 = arith.addf %140, %143 : vector<16x32xf32>
    %145 = arith.addf %144, %115 : vector<16x32xf32>
    %c8 = arith.constant 8 : index
    %c0_44 = arith.constant 0 : index
    %146 = vector.load %arg3[%c8, %c0_44] : memref<22x128xf32, #tpu.memory_space<vmem>>, vector<1x128xf32>
    %147 = vector.extract_strided_slice %146 {offsets = [0, 0], sizes = [1, 32], strides = [1, 1]} : vector<1x128xf32> to vector<1x32xf32>
    %c9 = arith.constant 9 : index
    %c0_45 = arith.constant 0 : index
    %148 = vector.load %arg3[%c9, %c0_45] : memref<22x128xf32, #tpu.memory_space<vmem>>, vector<1x128xf32>
    %149 = vector.extract_strided_slice %148 {offsets = [0, 0], sizes = [1, 32], strides = [1, 1]} : vector<1x128xf32> to vector<1x32xf32>
    %cst_46 = arith.constant dense<0.000000e+00> : vector<16xf32>
    %150 = vector.multi_reduction <add>, %145, %cst_46 [1] : vector<16x32xf32> to vector<16xf32>
    %151 = vector.shape_cast %150 : vector<16xf32> to vector<16x1xf32>
    %cst_47 = arith.constant 3.200000e+01 : f32
    %152 = vector.broadcast %cst_47 : f32 to vector<16x1xf32>
    %153 = arith.divf %151, %152 : vector<16x1xf32>
    %154 = vector.broadcast %153 : vector<16x1xf32> to vector<16x32xf32>
    %155 = arith.subf %145, %154 : vector<16x32xf32>
    %156 = arith.mulf %155, %155 : vector<16x32xf32>
    %cst_48 = arith.constant dense<0.000000e+00> : vector<16xf32>
    %157 = vector.multi_reduction <add>, %156, %cst_48 [1] : vector<16x32xf32> to vector<16xf32>
    %158 = vector.shape_cast %157 : vector<16xf32> to vector<16x1xf32>
    %cst_49 = arith.constant 3.200000e+01 : f32
    %159 = vector.broadcast %cst_49 : f32 to vector<16x1xf32>
    %160 = arith.divf %158, %159 : vector<16x1xf32>
    %161 = vector.broadcast %153 : vector<16x1xf32> to vector<16x32xf32>
    %162 = arith.subf %145, %161 : vector<16x32xf32>
    %cst_50 = arith.constant 9.99999974E-6 : f32
    %163 = vector.broadcast %cst_50 : f32 to vector<16x1xf32>
    %164 = arith.addf %160, %163 : vector<16x1xf32>
    %165 = math.rsqrt %164 : vector<16x1xf32>
    %166 = vector.broadcast %165 : vector<16x1xf32> to vector<16x32xf32>
    %167 = arith.mulf %162, %166 : vector<16x32xf32>
    %168 = vector.broadcast %147 : vector<1x32xf32> to vector<16x32xf32>
    %169 = arith.mulf %167, %168 : vector<16x32xf32>
    %170 = vector.broadcast %149 : vector<1x32xf32> to vector<16x32xf32>
    %171 = arith.addf %169, %170 : vector<16x32xf32>
    %172 = arith.truncf %171 : vector<16x32xf32> to vector<16x32xbf16>
    %c160 = arith.constant 160 : index
    %c0_51 = arith.constant 0 : index
    %173 = vector.load %arg2[%c160, %c0_51] : memref<384x128xbf16, #tpu.memory_space<vmem>>, vector<32x128xbf16>
    %cst_52 = arith.constant dense<0.000000e+00> : vector<16x128xf32>
    %174 = tpu.matmul %172, %173, %cst_52 {dimension_numbers = #tpu.dot_dimension_numbers<[1], [0], [0], [1], [0, 0, 1, 1], [], []>} : vector<16x32xbf16>, vector<32x128xbf16>, vector<16x128xf32> -> vector<16x128xf32>
    %c10 = arith.constant 10 : index
    %c0_53 = arith.constant 0 : index
    %175 = vector.load %arg3[%c10, %c0_53] : memref<22x128xf32, #tpu.memory_space<vmem>>, vector<1x128xf32>
    %176 = vector.broadcast %175 : vector<1x128xf32> to vector<16x128xf32>
    %177 = arith.addf %174, %176 : vector<16x128xf32>
    %178 = vector.extract_strided_slice %177 {offsets = [0, 0], sizes = [16, 16], strides = [1, 1]} : vector<16x128xf32> to vector<16x16xf32>
    %179 = arith.truncf %178 : vector<16x16xf32> to vector<16x16xbf16>
    %180 = vector.extract_strided_slice %177 {offsets = [0, 32], sizes = [16, 16], strides = [1, 1]} : vector<16x128xf32> to vector<16x16xf32>
    %181 = arith.truncf %180 : vector<16x16xf32> to vector<16x16xbf16>
    %182 = vector.extract_strided_slice %177 {offsets = [0, 64], sizes = [16, 16], strides = [1, 1]} : vector<16x128xf32> to vector<16x16xf32>
    %183 = arith.truncf %182 : vector<16x16xf32> to vector<16x16xbf16>
    %184 = tpu.transpose %181, [1, 0] : vector<16x16xbf16> -> vector<16x16xbf16>
    %cst_54 = arith.constant dense<0.000000e+00> : vector<16x16xf32>
    %185 = tpu.matmul %179, %184, %cst_54 {dimension_numbers = #tpu.dot_dimension_numbers<[1], [0], [0], [1], [0, 0, 1, 1], [], []>} : vector<16x16xbf16>, vector<16x16xbf16>, vector<16x16xf32> -> vector<16x16xf32>
    %cst_55 = arith.constant 2.500000e-01 : f32
    %186 = vector.broadcast %cst_55 : f32 to vector<16x16xf32>
    %187 = arith.mulf %185, %186 : vector<16x16xf32>
    %188 = arith.addf %187, %0 : vector<16x16xf32>
    %cst_56 = arith.constant dense<0xFF800000> : vector<16xf32>
    %189 = vector.multi_reduction <maximumf>, %188, %cst_56 [1] : vector<16x16xf32> to vector<16xf32>
    %190 = vector.shape_cast %189 : vector<16xf32> to vector<16x1xf32>
    %191 = vector.broadcast %190 : vector<16x1xf32> to vector<16x16xf32>
    %192 = arith.subf %188, %191 : vector<16x16xf32>
    %193 = math.exp %192 : vector<16x16xf32>
    %cst_57 = arith.constant dense<0.000000e+00> : vector<16xf32>
    %194 = vector.multi_reduction <add>, %193, %cst_57 [1] : vector<16x16xf32> to vector<16xf32>
    %195 = vector.shape_cast %194 : vector<16xf32> to vector<16x1xf32>
    %196 = tpu.reciprocal %195 {approx = true} : vector<16x1xf32> -> vector<16x1xf32>
    %197 = vector.broadcast %196 : vector<16x1xf32> to vector<16x16xf32>
    %198 = arith.mulf %193, %197 : vector<16x16xf32>
    %199 = arith.truncf %198 : vector<16x16xf32> to vector<16x16xbf16>
    %cst_58 = arith.constant dense<0.000000e+00> : vector<16x16xf32>
    %200 = tpu.matmul %199, %183, %cst_58 {dimension_numbers = #tpu.dot_dimension_numbers<[1], [0], [0], [1], [0, 0, 1, 1], [], []>} : vector<16x16xbf16>, vector<16x16xbf16>, vector<16x16xf32> -> vector<16x16xf32>
    %201 = vector.extract_strided_slice %177 {offsets = [0, 16], sizes = [16, 16], strides = [1, 1]} : vector<16x128xf32> to vector<16x16xf32>
    %202 = arith.truncf %201 : vector<16x16xf32> to vector<16x16xbf16>
    %203 = vector.extract_strided_slice %177 {offsets = [0, 48], sizes = [16, 16], strides = [1, 1]} : vector<16x128xf32> to vector<16x16xf32>
    %204 = arith.truncf %203 : vector<16x16xf32> to vector<16x16xbf16>
    %205 = vector.extract_strided_slice %177 {offsets = [0, 80], sizes = [16, 16], strides = [1, 1]} : vector<16x128xf32> to vector<16x16xf32>
    %206 = arith.truncf %205 : vector<16x16xf32> to vector<16x16xbf16>
    %207 = tpu.transpose %204, [1, 0] : vector<16x16xbf16> -> vector<16x16xbf16>
    %cst_59 = arith.constant dense<0.000000e+00> : vector<16x16xf32>
    %208 = tpu.matmul %202, %207, %cst_59 {dimension_numbers = #tpu.dot_dimension_numbers<[1], [0], [0], [1], [0, 0, 1, 1], [], []>} : vector<16x16xbf16>, vector<16x16xbf16>, vector<16x16xf32> -> vector<16x16xf32>
    %cst_60 = arith.constant 2.500000e-01 : f32
    %209 = vector.broadcast %cst_60 : f32 to vector<16x16xf32>
    %210 = arith.mulf %208, %209 : vector<16x16xf32>
    %211 = arith.addf %210, %0 : vector<16x16xf32>
    %cst_61 = arith.constant dense<0xFF800000> : vector<16xf32>
    %212 = vector.multi_reduction <maximumf>, %211, %cst_61 [1] : vector<16x16xf32> to vector<16xf32>
    %213 = vector.shape_cast %212 : vector<16xf32> to vector<16x1xf32>
    %214 = vector.broadcast %213 : vector<16x1xf32> to vector<16x16xf32>
    %215 = arith.subf %211, %214 : vector<16x16xf32>
    %216 = math.exp %215 : vector<16x16xf32>
    %cst_62 = arith.constant dense<0.000000e+00> : vector<16xf32>
    %217 = vector.multi_reduction <add>, %216, %cst_62 [1] : vector<16x16xf32> to vector<16xf32>
    %218 = vector.shape_cast %217 : vector<16xf32> to vector<16x1xf32>
    %219 = tpu.reciprocal %218 {approx = true} : vector<16x1xf32> -> vector<16x1xf32>
    %220 = vector.broadcast %219 : vector<16x1xf32> to vector<16x16xf32>
    %221 = arith.mulf %216, %220 : vector<16x16xf32>
    %222 = arith.truncf %221 : vector<16x16xf32> to vector<16x16xbf16>
    %cst_63 = arith.constant dense<0.000000e+00> : vector<16x16xf32>
    %223 = tpu.matmul %222, %206, %cst_63 {dimension_numbers = #tpu.dot_dimension_numbers<[1], [0], [0], [1], [0, 0, 1, 1], [], []>} : vector<16x16xbf16>, vector<16x16xbf16>, vector<16x16xf32> -> vector<16x16xf32>
    %224 = tpu.concatenate %200, %223 in 1 : vector<16x16xf32>, vector<16x16xf32> -> vector<16x32xf32>
    %225 = arith.truncf %224 : vector<16x32xf32> to vector<16x32xbf16>
    %c192 = arith.constant 192 : index
    %c0_64 = arith.constant 0 : index
    %226 = vector.load %arg2[%c192, %c0_64] : memref<384x128xbf16, #tpu.memory_space<vmem>>, vector<32x128xbf16>
    %cst_65 = arith.constant dense<0.000000e+00> : vector<16x128xf32>
    %227 = tpu.matmul %225, %226, %cst_65 {dimension_numbers = #tpu.dot_dimension_numbers<[1], [0], [0], [1], [0, 0, 1, 1], [], []>} : vector<16x32xbf16>, vector<32x128xbf16>, vector<16x128xf32> -> vector<16x128xf32>
    %228 = vector.extract_strided_slice %227 {offsets = [0, 0], sizes = [16, 32], strides = [1, 1]} : vector<16x128xf32> to vector<16x32xf32>
    %c11 = arith.constant 11 : index
    %c0_66 = arith.constant 0 : index
    %229 = vector.load %arg3[%c11, %c0_66] : memref<22x128xf32, #tpu.memory_space<vmem>>, vector<1x128xf32>
    %230 = vector.extract_strided_slice %229 {offsets = [0, 0], sizes = [1, 32], strides = [1, 1]} : vector<1x128xf32> to vector<1x32xf32>
    %231 = vector.broadcast %230 : vector<1x32xf32> to vector<16x32xf32>
    %232 = arith.addf %228, %231 : vector<16x32xf32>
    %233 = arith.addf %232, %171 : vector<16x32xf32>
    %c12 = arith.constant 12 : index
    %c0_67 = arith.constant 0 : index
    %234 = vector.load %arg3[%c12, %c0_67] : memref<22x128xf32, #tpu.memory_space<vmem>>, vector<1x128xf32>
    %235 = vector.extract_strided_slice %234 {offsets = [0, 0], sizes = [1, 32], strides = [1, 1]} : vector<1x128xf32> to vector<1x32xf32>
    %c13 = arith.constant 13 : index
    %c0_68 = arith.constant 0 : index
    %236 = vector.load %arg3[%c13, %c0_68] : memref<22x128xf32, #tpu.memory_space<vmem>>, vector<1x128xf32>
    %237 = vector.extract_strided_slice %236 {offsets = [0, 0], sizes = [1, 32], strides = [1, 1]} : vector<1x128xf32> to vector<1x32xf32>
    %cst_69 = arith.constant dense<0.000000e+00> : vector<16xf32>
    %238 = vector.multi_reduction <add>, %233, %cst_69 [1] : vector<16x32xf32> to vector<16xf32>
    %239 = vector.shape_cast %238 : vector<16xf32> to vector<16x1xf32>
    %cst_70 = arith.constant 3.200000e+01 : f32
    %240 = vector.broadcast %cst_70 : f32 to vector<16x1xf32>
    %241 = arith.divf %239, %240 : vector<16x1xf32>
    %242 = vector.broadcast %241 : vector<16x1xf32> to vector<16x32xf32>
    %243 = arith.subf %233, %242 : vector<16x32xf32>
    %244 = arith.mulf %243, %243 : vector<16x32xf32>
    %cst_71 = arith.constant dense<0.000000e+00> : vector<16xf32>
    %245 = vector.multi_reduction <add>, %244, %cst_71 [1] : vector<16x32xf32> to vector<16xf32>
    %246 = vector.shape_cast %245 : vector<16xf32> to vector<16x1xf32>
    %cst_72 = arith.constant 3.200000e+01 : f32
    %247 = vector.broadcast %cst_72 : f32 to vector<16x1xf32>
    %248 = arith.divf %246, %247 : vector<16x1xf32>
    %249 = vector.broadcast %241 : vector<16x1xf32> to vector<16x32xf32>
    %250 = arith.subf %233, %249 : vector<16x32xf32>
    %cst_73 = arith.constant 9.99999974E-6 : f32
    %251 = vector.broadcast %cst_73 : f32 to vector<16x1xf32>
    %252 = arith.addf %248, %251 : vector<16x1xf32>
    %253 = math.rsqrt %252 : vector<16x1xf32>
    %254 = vector.broadcast %253 : vector<16x1xf32> to vector<16x32xf32>
    %255 = arith.mulf %250, %254 : vector<16x32xf32>
    %256 = vector.broadcast %235 : vector<1x32xf32> to vector<16x32xf32>
    %257 = arith.mulf %255, %256 : vector<16x32xf32>
    %258 = vector.broadcast %237 : vector<1x32xf32> to vector<16x32xf32>
    %259 = arith.addf %257, %258 : vector<16x32xf32>
    %260 = arith.truncf %259 : vector<16x32xf32> to vector<16x32xbf16>
    %c224 = arith.constant 224 : index
    %c0_74 = arith.constant 0 : index
    %261 = vector.load %arg2[%c224, %c0_74] : memref<384x128xbf16, #tpu.memory_space<vmem>>, vector<32x128xbf16>
    %cst_75 = arith.constant dense<0.000000e+00> : vector<16x128xf32>
    %262 = tpu.matmul %260, %261, %cst_75 {dimension_numbers = #tpu.dot_dimension_numbers<[1], [0], [0], [1], [0, 0, 1, 1], [], []>} : vector<16x32xbf16>, vector<32x128xbf16>, vector<16x128xf32> -> vector<16x128xf32>
    %263 = vector.extract_strided_slice %262 {offsets = [0, 0], sizes = [16, 64], strides = [1, 1]} : vector<16x128xf32> to vector<16x64xf32>
    %c14 = arith.constant 14 : index
    %c0_76 = arith.constant 0 : index
    %264 = vector.load %arg3[%c14, %c0_76] : memref<22x128xf32, #tpu.memory_space<vmem>>, vector<1x128xf32>
    %265 = vector.extract_strided_slice %264 {offsets = [0, 0], sizes = [1, 64], strides = [1, 1]} : vector<1x128xf32> to vector<1x64xf32>
    %266 = vector.broadcast %265 : vector<1x64xf32> to vector<16x64xf32>
    %267 = arith.addf %263, %266 : vector<16x64xf32>
    %cst_77 = arith.constant 5.000000e-01 : f32
    %268 = vector.broadcast %cst_77 : f32 to vector<16x64xf32>
    %269 = arith.mulf %268, %267 : vector<16x64xf32>
    %cst_78 = arith.constant 4.471500e-02 : f32
    %270 = vector.broadcast %cst_78 : f32 to vector<16x64xf32>
    %271 = arith.mulf %270, %267 : vector<16x64xf32>
    %272 = arith.mulf %271, %267 : vector<16x64xf32>
    %273 = arith.mulf %272, %267 : vector<16x64xf32>
    %274 = arith.addf %267, %273 : vector<16x64xf32>
    %cst_79 = arith.constant 0.797884583 : f32
    %275 = vector.broadcast %cst_79 : f32 to vector<16x64xf32>
    %276 = arith.mulf %275, %274 : vector<16x64xf32>
    %277 = math.tanh %276 : vector<16x64xf32>
    %cst_80 = arith.constant 1.000000e+00 : f32
    %278 = vector.broadcast %cst_80 : f32 to vector<16x64xf32>
    %279 = arith.addf %278, %277 : vector<16x64xf32>
    %280 = arith.mulf %269, %279 : vector<16x64xf32>
    %281 = arith.truncf %280 : vector<16x64xf32> to vector<16x64xbf16>
    %c256 = arith.constant 256 : index
    %c0_81 = arith.constant 0 : index
    %282 = vector.load %arg2[%c256, %c0_81] : memref<384x128xbf16, #tpu.memory_space<vmem>>, vector<64x128xbf16>
    %cst_82 = arith.constant dense<0.000000e+00> : vector<16x128xf32>
    %283 = tpu.matmul %281, %282, %cst_82 {dimension_numbers = #tpu.dot_dimension_numbers<[1], [0], [0], [1], [0, 0, 1, 1], [], []>} : vector<16x64xbf16>, vector<64x128xbf16>, vector<16x128xf32> -> vector<16x128xf32>
    %284 = vector.extract_strided_slice %283 {offsets = [0, 0], sizes = [16, 32], strides = [1, 1]} : vector<16x128xf32> to vector<16x32xf32>
    %c15 = arith.constant 15 : index
    %c0_83 = arith.constant 0 : index
    %285 = vector.load %arg3[%c15, %c0_83] : memref<22x128xf32, #tpu.memory_space<vmem>>, vector<1x128xf32>
    %286 = vector.extract_strided_slice %285 {offsets = [0, 0], sizes = [1, 32], strides = [1, 1]} : vector<1x128xf32> to vector<1x32xf32>
    %287 = vector.broadcast %286 : vector<1x32xf32> to vector<16x32xf32>
    %288 = arith.addf %284, %287 : vector<16x32xf32>
    %289 = arith.addf %288, %259 : vector<16x32xf32>
    %c16 = arith.constant 16 : index
    %c0_84 = arith.constant 0 : index
    %290 = vector.load %arg3[%c16, %c0_84] : memref<22x128xf32, #tpu.memory_space<vmem>>, vector<1x128xf32>
    %291 = vector.extract_strided_slice %290 {offsets = [0, 0], sizes = [1, 32], strides = [1, 1]} : vector<1x128xf32> to vector<1x32xf32>
    %c17 = arith.constant 17 : index
    %c0_85 = arith.constant 0 : index
    %292 = vector.load %arg3[%c17, %c0_85] : memref<22x128xf32, #tpu.memory_space<vmem>>, vector<1x128xf32>
    %293 = vector.extract_strided_slice %292 {offsets = [0, 0], sizes = [1, 32], strides = [1, 1]} : vector<1x128xf32> to vector<1x32xf32>
    %cst_86 = arith.constant dense<0.000000e+00> : vector<16xf32>
    %294 = vector.multi_reduction <add>, %289, %cst_86 [1] : vector<16x32xf32> to vector<16xf32>
    %295 = vector.shape_cast %294 : vector<16xf32> to vector<16x1xf32>
    %cst_87 = arith.constant 3.200000e+01 : f32
    %296 = vector.broadcast %cst_87 : f32 to vector<16x1xf32>
    %297 = arith.divf %295, %296 : vector<16x1xf32>
    %298 = vector.broadcast %297 : vector<16x1xf32> to vector<16x32xf32>
    %299 = arith.subf %289, %298 : vector<16x32xf32>
    %300 = arith.mulf %299, %299 : vector<16x32xf32>
    %cst_88 = arith.constant dense<0.000000e+00> : vector<16xf32>
    %301 = vector.multi_reduction <add>, %300, %cst_88 [1] : vector<16x32xf32> to vector<16xf32>
    %302 = vector.shape_cast %301 : vector<16xf32> to vector<16x1xf32>
    %cst_89 = arith.constant 3.200000e+01 : f32
    %303 = vector.broadcast %cst_89 : f32 to vector<16x1xf32>
    %304 = arith.divf %302, %303 : vector<16x1xf32>
    %305 = vector.broadcast %297 : vector<16x1xf32> to vector<16x32xf32>
    %306 = arith.subf %289, %305 : vector<16x32xf32>
    %cst_90 = arith.constant 9.99999974E-6 : f32
    %307 = vector.broadcast %cst_90 : f32 to vector<16x1xf32>
    %308 = arith.addf %304, %307 : vector<16x1xf32>
    %309 = math.rsqrt %308 : vector<16x1xf32>
    %310 = vector.broadcast %309 : vector<16x1xf32> to vector<16x32xf32>
    %311 = arith.mulf %306, %310 : vector<16x32xf32>
    %312 = vector.broadcast %291 : vector<1x32xf32> to vector<16x32xf32>
    %313 = arith.mulf %311, %312 : vector<16x32xf32>
    %314 = vector.broadcast %293 : vector<1x32xf32> to vector<16x32xf32>
    %315 = arith.addf %313, %314 : vector<16x32xf32>
    %316 = arith.truncf %315 : vector<16x32xf32> to vector<16x32xbf16>
    %c320 = arith.constant 320 : index
    %c0_91 = arith.constant 0 : index
    %317 = vector.load %arg2[%c320, %c0_91] : memref<384x128xbf16, #tpu.memory_space<vmem>>, vector<32x128xbf16>
    %cst_92 = arith.constant dense<0.000000e+00> : vector<16x128xf32>
    %318 = tpu.matmul %316, %317, %cst_92 {dimension_numbers = #tpu.dot_dimension_numbers<[1], [0], [0], [1], [0, 0, 1, 1], [], []>} : vector<16x32xbf16>, vector<32x128xbf16>, vector<16x128xf32> -> vector<16x128xf32>
    %319 = vector.extract_strided_slice %318 {offsets = [0, 0], sizes = [16, 32], strides = [1, 1]} : vector<16x128xf32> to vector<16x32xf32>
    %c18 = arith.constant 18 : index
    %c0_93 = arith.constant 0 : index
    %320 = vector.load %arg3[%c18, %c0_93] : memref<22x128xf32, #tpu.memory_space<vmem>>, vector<1x128xf32>
    %321 = vector.extract_strided_slice %320 {offsets = [0, 0], sizes = [1, 32], strides = [1, 1]} : vector<1x128xf32> to vector<1x32xf32>
    %322 = vector.broadcast %321 : vector<1x32xf32> to vector<16x32xf32>
    %323 = arith.addf %319, %322 : vector<16x32xf32>
    %cst_94 = arith.constant 5.000000e-01 : f32
    %324 = vector.broadcast %cst_94 : f32 to vector<16x32xf32>
    %325 = arith.mulf %324, %323 : vector<16x32xf32>
    %cst_95 = arith.constant 4.471500e-02 : f32
    %326 = vector.broadcast %cst_95 : f32 to vector<16x32xf32>
    %327 = arith.mulf %326, %323 : vector<16x32xf32>
    %328 = arith.mulf %327, %323 : vector<16x32xf32>
    %329 = arith.mulf %328, %323 : vector<16x32xf32>
    %330 = arith.addf %323, %329 : vector<16x32xf32>
    %cst_96 = arith.constant 0.797884583 : f32
    %331 = vector.broadcast %cst_96 : f32 to vector<16x32xf32>
    %332 = arith.mulf %331, %330 : vector<16x32xf32>
    %333 = math.tanh %332 : vector<16x32xf32>
    %cst_97 = arith.constant 1.000000e+00 : f32
    %334 = vector.broadcast %cst_97 : f32 to vector<16x32xf32>
    %335 = arith.addf %334, %333 : vector<16x32xf32>
    %336 = arith.mulf %325, %335 : vector<16x32xf32>
    %c19 = arith.constant 19 : index
    %c0_98 = arith.constant 0 : index
    %337 = vector.load %arg3[%c19, %c0_98] : memref<22x128xf32, #tpu.memory_space<vmem>>, vector<1x128xf32>
    %338 = vector.extract_strided_slice %337 {offsets = [0, 0], sizes = [1, 32], strides = [1, 1]} : vector<1x128xf32> to vector<1x32xf32>
    %c20 = arith.constant 20 : index
    %c0_99 = arith.constant 0 : index
    %339 = vector.load %arg3[%c20, %c0_99] : memref<22x128xf32, #tpu.memory_space<vmem>>, vector<1x128xf32>
    %340 = vector.extract_strided_slice %339 {offsets = [0, 0], sizes = [1, 32], strides = [1, 1]} : vector<1x128xf32> to vector<1x32xf32>
    %cst_100 = arith.constant dense<0.000000e+00> : vector<16xf32>
    %341 = vector.multi_reduction <add>, %336, %cst_100 [1] : vector<16x32xf32> to vector<16xf32>
    %342 = vector.shape_cast %341 : vector<16xf32> to vector<16x1xf32>
    %cst_101 = arith.constant 3.200000e+01 : f32
    %343 = vector.broadcast %cst_101 : f32 to vector<16x1xf32>
    %344 = arith.divf %342, %343 : vector<16x1xf32>
    %345 = vector.broadcast %344 : vector<16x1xf32> to vector<16x32xf32>
    %346 = arith.subf %336, %345 : vector<16x32xf32>
    %347 = arith.mulf %346, %346 : vector<16x32xf32>
    %cst_102 = arith.constant dense<0.000000e+00> : vector<16xf32>
    %348 = vector.multi_reduction <add>, %347, %cst_102 [1] : vector<16x32xf32> to vector<16xf32>
    %349 = vector.shape_cast %348 : vector<16xf32> to vector<16x1xf32>
    %cst_103 = arith.constant 3.200000e+01 : f32
    %350 = vector.broadcast %cst_103 : f32 to vector<16x1xf32>
    %351 = arith.divf %349, %350 : vector<16x1xf32>
    %352 = vector.broadcast %344 : vector<16x1xf32> to vector<16x32xf32>
    %353 = arith.subf %336, %352 : vector<16x32xf32>
    %cst_104 = arith.constant 9.99999974E-6 : f32
    %354 = vector.broadcast %cst_104 : f32 to vector<16x1xf32>
    %355 = arith.addf %351, %354 : vector<16x1xf32>
    %356 = math.rsqrt %355 : vector<16x1xf32>
    %357 = vector.broadcast %356 : vector<16x1xf32> to vector<16x32xf32>
    %358 = arith.mulf %353, %357 : vector<16x32xf32>
    %359 = vector.broadcast %338 : vector<1x32xf32> to vector<16x32xf32>
    %360 = arith.mulf %358, %359 : vector<16x32xf32>
    %361 = vector.broadcast %340 : vector<1x32xf32> to vector<16x32xf32>
    %362 = arith.addf %360, %361 : vector<16x32xf32>
    %363 = arith.truncf %362 : vector<16x32xf32> to vector<16x32xbf16>
    %c352 = arith.constant 352 : index
    %c0_105 = arith.constant 0 : index
    %364 = vector.load %arg2[%c352, %c0_105] : memref<384x128xbf16, #tpu.memory_space<vmem>>, vector<32x128xbf16>
    %cst_106 = arith.constant dense<0.000000e+00> : vector<16x128xf32>
    %365 = tpu.matmul %363, %364, %cst_106 {dimension_numbers = #tpu.dot_dimension_numbers<[1], [0], [0], [1], [0, 0, 1, 1], [], []>} : vector<16x32xbf16>, vector<32x128xbf16>, vector<16x128xf32> -> vector<16x128xf32>
    %c21 = arith.constant 21 : index
    %c0_107 = arith.constant 0 : index
    %366 = vector.load %arg3[%c21, %c0_107] : memref<22x128xf32, #tpu.memory_space<vmem>>, vector<1x128xf32>
    %367 = vector.broadcast %366 : vector<1x128xf32> to vector<16x128xf32>
    %368 = arith.addf %365, %367 : vector<16x128xf32>
    %c0_108 = arith.constant 0 : index
    %c0_109 = arith.constant 0 : index
    %369 = vector.load %arg4[%c0_108, %c0_109] : memref<16x128xf32, #tpu.memory_space<vmem>>, vector<16x128xf32>
    tpu.vector_store %arg4[%c0_108, %c0_109], %368 {strides = array<i32>} : memref<16x128xf32, #tpu.memory_space<vmem>>, vector<16x128xf32>,
    return
  }
}

</mosaic_0001>

<llo_original>
// kernel: eq.8
$region0: #{eq.8}
  %s0 = inlined_call_operand.vmem [shape: s32[2,8], index: 0, kind: input, shape index: {}]
  %s1 = inlined_call_operand.vmem [shape: s32[16], index: 1, kind: output, shape index: {}]
  $region1: #{eq.8} parent=0
    #allocation0 [shape = 'u8[4096]{0}', space=vmem, size = 0x1000, scoped, tag = 'scoped mem for output reshape']
    #allocation1 [shape = 'u8[4096]{0}', space=vmem, size = 0x1000, scoped, tag = 'scoped mem for input reshape']
    %s3 = sshllo.u32 0, 2
    %v4 = vld [vmem:[%s0] sm:%s3]
    %5 = vst [vmem:[#allocation1] sm:%s3] %v4
    %v6 = vld [vmem:[#allocation1] sm:$0x1]
    %vm7 = vcmask 64512
    %8 = vst.msk [vmem:[#allocation0] sm:$0x1] %vm7, %v6
    %s9 = scalar_lea.vmem [#allocation1], 1
    %v10 = vld [vmem:[%s9] sm:$0x1]
    %11 = vrot.lane.b32.xlu0 %v10, 8
    %v12 = vpop.permute.xlu0 %11
    %vm13 = vcmask 130112
    %14 = vst.msk [vmem:[#allocation0] sm:$0x1] %vm13, %v12
    %s16 = sshllo.u32 0, 1
    %v18 = vld [vmem:[#allocation0] sm:%s16]
    %s19 = sshllo.u32 0, 1
    %20 = vst [vmem:[%s1] sm:%s19] %v18

// kernel: fwd.1
$region0: #{fwd.1}
  #allocation0 [shape = 'u32[]', space=smem, size = 0x4, offset = 0x4, fixed_abs, tag = 'smem constant byte address 0x4 - core index']
  #allocation1 [shape = 'u32[144,128]{1,0:T(1,128)}', space=vmem, size = 0x12000, scoped, tag = 'internal scratch']
  %s0 = inlined_call_operand.vmem [shape: f32[16,32], index: 0, kind: input, shape index: {}]
  %s1 = inlined_call_operand.vmem [shape: f32[16,16], index: 1, kind: input, shape index: {}]
  %s2 = inlined_call_operand.vmem [shape: bf16[384,128], index: 2, kind: input, shape index: {}]
  %s3 = inlined_call_operand.vmem [shape: f32[22,128], index: 3, kind: input, shape index: {}]
  %s4 = inlined_call_operand.hbm [shape: f32[16,128], index: 4, kind: output, shape index: {}]
  %s5 = sld [smem:[#allocation0]]
  $region26: #{fwd.1} parent=0
    _
  %s7 = ssub.s32 1, %s5
  %s8 = scalar_select 0, %s7, %s5
  $region1: #{fwd.1} parent=0
    #allocation2 [shape = 'u8[8192]{0}', space=vmem, size = 0x2000, scoped, tag = 'output window, operand 0, single buffered']
    #allocation3 [shape = 's32[1]{0}', space=sflag, size = 0x4, scoped, tag = 'scoped memory for fwd.1']
    %9 = vsyncpa [#allocation3], 0
    // Predicated region
    $region2: #{fwd.1} parent=1 // pred_check
      _
    $region3: #{fwd.1} parent=1 // pred_check_branch
      %11 = sbr.rel (0) target = $region5
    $region4: #{fwd.1} parent=1 // pred_region
      _
    $region5: #{fwd.1} parent=1 // pred_fallthru
      _
    // Predicated region
    $region6: #{fwd.1} parent=1 // pred_check
      _
    $region7: #{fwd.1} parent=1 // pred_check_branch
      %13 = sbr.rel (0) target = $region9
    $region8: #{fwd.1} parent=1 // pred_region
      _
    $region9: #{fwd.1} parent=1 // pred_fallthru
      _
    // Predicated region
    $region10: #{fwd.1} parent=1 // pred_check
      _
    $region11: #{fwd.1} parent=1 // pred_check_branch
      %15 = sbr.rel (0) target = $region13
    $region12: #{fwd.1} parent=1 // pred_region
      _
    $region13: #{fwd.1} parent=1 // pred_fallthru
      _
    // Predicated region
    $region14: #{fwd.1} parent=1 // pred_check
      _
    $region15: #{fwd.1} parent=1 // pred_check_branch
      %17 = sbr.rel (0) target = $region17
    $region16: #{fwd.1} parent=1 // pred_region
      _
    $region17: #{fwd.1} parent=1 // pred_fallthru
      _
    %v19 = vld [vmem:[%s1] sm:$0xff]
    %v20 = vld [vmem:[%s1 + $0x8] sm:$0xff]
    %v21 = vld [vmem:[%s0] sm:$0xff]
    %v22 = vld [vmem:[%s0 + $0x8] sm:$0xff]
    %v23 = vld [vmem:[%s3] sm:$0x1]
    %v24 = vld [vmem:[%s3 + $0x1] sm:$0x1]
    %vm25 = vcmask 261120
    %v26 = vsel %vm25, %v21, 0.0
    %27 = vadd.xlane.f32.xlu0 %v26
    %v28 = vpop.xlane.xlu0 %27
    %v29 = vsel %vm25, %v22, 0.0
    %30 = vadd.xlane.f32.xlu0 %v29
    %v31 = vpop.xlane.xlu0 %30
    %v32 = vrcp.pop 32.0
    %v33 = vmul.f32 %v28, %v32
    %v34 = vmul.f32 %v31, %v32
    %v35 = vsub.f32 %v21, %v33
    %v36 = vsub.f32 %v22, %v34
    %v37 = vmul.f32 %v35, %v35
    %v38 = vmul.f32 %v36, %v36
    %v39 = vsel %vm25, %v37, 0.0
    %40 = vadd.xlane.f32.xlu0 %v39
    %v41 = vpop.xlane.xlu0 %40
    %v42 = vsel %vm25, %v38, 0.0
    %43 = vadd.xlane.f32.xlu0 %v42
    %v44 = vpop.xlane.xlu0 %43
    %v45 = vmul.f32 %v41, %v32
    %v46 = vmul.f32 %v44, %v32
    %v47 = vadd.f32 %v45, 1e-05
    %v48 = vadd.f32 %v46, 1e-05
    %v49 = vrsqrt.pop %v47
    %v50 = vrsqrt.pop %v48
    %v51 = vmul.f32 %v35, %v49
    %v52 = vmul.f32 %v36, %v50
    %v53 = vlaneseq
    %v54 = vshrl.u32 %v53, 7
    %v55 = vsub.s32 0, %v54
    %v56 = vrot.slane %v23, %v55
    %v57 = vmul.f32 %v51, %v56
    %v58 = vmul.f32 %v52, %v56
    %v59 = vlaneseq
    %v60 = vshrl.u32 %v59, 7
    %v61 = vsub.s32 0, %v60
    %v62 = vrot.slane %v24, %v61
    %v63 = vadd.f32 %v57, %v62
    %v64 = vadd.f32 %v58, %v62
    %v65 = vpack.c.bf16 %v64, %v63
    %v66 = vld [vmem:[%s2] sm:$0xf]
    %v67 = vld [vmem:[%s2 + $0x4] sm:$0xf]
    %v68 = vld [vmem:[%s2 + $0x8] sm:$0xf]
    %v69 = vld [vmem:[%s2 + $0xc] sm:$0xf]
    %v70 = vld [vmem:[%s3 + $0x2] sm:$0x1]
    %v71 = vlaneseq
    %v72 = vshrl.u32 %v71, 7
    %v73 = vsub.s32 0, %v72
    %v74 = vrot.slane %v70, %v73
    %v79 = vunpack.c.l.b16 %v66
    %v80 = vunpack.c.l.b16 %v67
    %v81 = vunpack.c.l.b16 %v68
    %v82 = vunpack.c.l.b16 %v69
    %v83 = vpack.c.b16 %v80, %v79
    %v84 = vpack.c.b16 %v82, %v81
    %v88 = vsel %vm25, %v65, 0
    %90 = vmatprep.subr.bf16.mxu0 0
    %91 = vmatpush1.bf16.msra.mxu0 %v83
    %92 = vmatprep.subr.bf16.mxu0 0
    %93 = vmatpush1.bf16.msra.mxu0 %v84
    %94 = vmatprep.subr.bf16.mxu0 0
    %95 = vmatpush1.bf16.msra.mxu0 0
    %96 = vmatprep.subr.bf16.mxu0 0
    %97 = vmatpush1.bf16.msra.mxu0 0
    %98 = vmatprep.subr.bf16.mxu0 0
    %99 = vmatpush1.bf16.msra.mxu0 0
    %100 = vmatprep.subr.bf16.mxu0 0
    %101 = vmatpush1.bf16.msra.mxu0 0
    %102 = vmatprep.subr.bf16.mxu0 0
    %103 = vmatpush1.bf16.msra.mxu0 0
    %104 = vmatprep.subr.bf16.mxu0 0
    %105 = vmatpush1.bf16.msra.mxu0 0
    %106 = vmatprep.subr.bf16.mxu0 0
    %107 = vmatpush1.bf16.msra.mxu0 0
    %108 = vmatprep.subr.bf16.mxu0 0
    %109 = vmatpush1.bf16.msra.mxu0 0
    %110 = vmatprep.subr.bf16.mxu0 0
    %111 = vmatpush1.bf16.msra.mxu0 0
    %112 = vmatprep.subr.bf16.mxu0 0
    %113 = vmatpush1.bf16.msra.mxu0 0
    %114 = vmatprep.subr.bf16.mxu0 0
    %115 = vmatpush1.bf16.msra.mxu0 0
    %116 = vmatprep.subr.bf16.mxu0 0
    %117 = vmatpush1.bf16.msra.mxu0 0
    %118 = vmatprep.subr.bf16.mxu0 0
    %119 = vmatpush1.bf16.msra.mxu0 0
    %120 = vmatprep.subr.bf16.mxu0 0
    %121 = vmatpush1.bf16.msra.mxu0 0
    %122 = vmatprep.mubr.bf16.mxu0 0
    %123 = vmatmul.mubr.bf16.gmra.mrb[0].mxu0 %v88
    %v124 = vpop.f32.mrb[0].mxu0
    %v125 = vadd.f32 %v74, %v124
    %v126 = vpop.f32.mrb[0].mxu0
    %v127 = vpop.f32.mrb[0].mxu0
    %v128 = vadd.f32 %v74, %v127
    %v129 = vpop.f32.mrb[0].mxu0
    %130 = vdwg.mxu0
    %v131 = vpack.c.bf16 %v128, %v125
    %133 = vrot.lane.b32.xlu0 %v131, 96
    %v134 = vpop.permute.xlu0 %133
    %vm135 = vcmask 130048
    %v137 = vsel %vm135, %v131, 0
    %v140 = vsel %vm135, %v134, 0
    %142 = vmatprep.subr.bf16.mxu0 0
    %143 = vmatpush1.bf16.xpose.msra.mxu0 %v140
    %144 = vmatprep.subr.bf16.mxu0 0
    %145 = vmatpush1.bf16.xpose.msra.mxu0 0
    %146 = vmatprep.subr.bf16.mxu0 0
    %147 = vmatpush1.bf16.xpose.msra.mxu0 0
    %148 = vmatprep.subr.bf16.mxu0 0
    %149 = vmatpush1.bf16.xpose.msra.mxu0 0
    %150 = vmatprep.subr.bf16.mxu0 0
    %151 = vmatpush1.bf16.xpose.msra.mxu0 0
    %152 = vmatprep.subr.bf16.mxu0 0
    %153 = vmatpush1.bf16.xpose.msra.mxu0 0
    %154 = vmatprep.subr.bf16.mxu0 0
    %155 = vmatpush1.bf16.xpose.msra.mxu0 0
    %156 = vmatprep.subr.bf16.mxu0 0
    %157 = vmatpush1.bf16.xpose.msra.mxu0 0
    %158 = vmatprep.subr.bf16.mxu0 0
    %159 = vmatpush1.bf16.xpose.msra.mxu0 0
    %160 = vmatprep.subr.bf16.mxu0 0
    %161 = vmatpush1.bf16.xpose.msra.mxu0 0
    %162 = vmatprep.subr.bf16.mxu0 0
    %163 = vmatpush1.bf16.xpose.msra.mxu0 0
    %164 = vmatprep.subr.bf16.mxu0 0
    %165 = vmatpush1.bf16.xpose.msra.mxu0 0
    %166 = vmatprep.subr.bf16.mxu0 0
    %167 = vmatpush1.bf16.xpose.msra.mxu0 0
    %168 = vmatprep.subr.bf16.mxu0 0
    %169 = vmatpush1.bf16.xpose.msra.mxu0 0
    %170 = vmatprep.subr.bf16.mxu0 0
    %171 = vmatpush1.bf16.xpose.msra.mxu0 0
    %172 = vmatprep.subr.bf16.mxu0 0
    %173 = vmatpush1.bf16.xpose.msra.mxu0 0
    %174 = vmatprep.mubr.bf16.mxu0 0
    %175 = vmatmul.mubr.bf16.gmra.mrb[0].mxu0 %v137
    %v176 = vpop.f32.mrb[0].mxu0
    %v177 = vadd.f32 0.0, %v176
    %v178 = vpop.f32.mrb[0].mxu0
    %v179 = vpop.f32.mrb[0].mxu0
    %v180 = vadd.f32 0.0, %v179
    %v181 = vpop.f32.mrb[0].mxu0
    %182 = vdwg.mxu0
    %v183 = vmul.f32 %v177, 0.25
    %v184 = vmul.f32 %v180, 0.25
    %v185 = vadd.f32 %v183, %v19
    %v186 = vadd.f32 %v184, %v20
    %v187 = vsel %vm135, %v185, -inf
    %188 = vmax.xlane.f32.xlu0 %v187
    %v189 = vpop.xlane.xlu0 %188
    %v190 = vsel %vm135, %v186, -inf
    %191 = vmax.xlane.f32.xlu0 %v190
    %v192 = vpop.xlane.xlu0 %191
    %v193 = vsub.f32 %v185, %v189
    %v194 = vsub.f32 %v186, %v192
    %v195 = vmul.f32 %v193, 1.442695
    %v196 = vpow.pop %v195
    %v197 = vmul.f32 %v194, 1.442695
    %v198 = vpow.pop %v197
    %v199 = vsel %vm135, %v196, 0.0
    %200 = vadd.xlane.f32.xlu0 %v199
    %v201 = vpop.xlane.xlu0 %200
    %v202 = vsel %vm135, %v198, 0.0
    %203 = vadd.xlane.f32.xlu0 %v202
    %v204 = vpop.xlane.xlu0 %203
    %v205 = vrcp.pop %v201
    %v206 = vrcp.pop %v204
    %v207 = vmul.f32 %v196, %v205
    %v208 = vmul.f32 %v198, %v206
    %v209 = vpack.c.bf16 %v208, %v207
    %210 = vrot.lane.b32.xlu0 %v131, 64
    %v211 = vpop.permute.xlu0 %210
    %v214 = vsel %vm135, %v209, 0
    %216 = vmatprep.subr.bf16.mxu0 0
    %217 = vmatpush1.bf16.msra.mxu0 %v211
    %218 = vmatprep.subr.bf16.mxu0 0
    %219 = vmatpush1.bf16.msra.mxu0 0
    %220 = vmatprep.subr.bf16.mxu0 0
    %221 = vmatpush1.bf16.msra.mxu0 0
    %222 = vmatprep.subr.bf16.mxu0 0
    %223 = vmatpush1.bf16.msra.mxu0 0
    %224 = vmatprep.subr.bf16.mxu0 0
    %225 = vmatpush1.bf16.msra.mxu0 0
    %226 = vmatprep.subr.bf16.mxu0 0
    %227 = vmatpush1.bf16.msra.mxu0 0
    %228 = vmatprep.subr.bf16.mxu0 0
    %229 = vmatpush1.bf16.msra.mxu0 0
    %230 = vmatprep.subr.bf16.mxu0 0
    %231 = vmatpush1.bf16.msra.mxu0 0
    %232 = vmatprep.subr.bf16.mxu0 0
    %233 = vmatpush1.bf16.msra.mxu0 0
    %234 = vmatprep.subr.bf16.mxu0 0
    %235 = vmatpush1.bf16.msra.mxu0 0
    %236 = vmatprep.subr.bf16.mxu0 0
    %237 = vmatpush1.bf16.msra.mxu0 0
    %238 = vmatprep.subr.bf16.mxu0 0
    %239 = vmatpush1.bf16.msra.mxu0 0
    %240 = vmatprep.subr.bf16.mxu0 0
    %241 = vmatpush1.bf16.msra.mxu0 0
    %242 = vmatprep.subr.bf16.mxu0 0
    %243 = vmatpush1.bf16.msra.mxu0 0
    %244 = vmatprep.subr.bf16.mxu0 0
    %245 = vmatpush1.bf16.msra.mxu0 0
    %246 = vmatprep.subr.bf16.mxu0 0
    %247 = vmatpush1.bf16.msra.mxu0 0
    %248 = vmatprep.mubr.bf16.mxu0 0
    %249 = vmatmul.mubr.bf16.gmra.mrb[0].mxu0 %v214
    %v250 = vpop.f32.mrb[0].mxu0
    %v251 = vadd.f32 0.0, %v250
    %v252 = vpop.f32.mrb[0].mxu0
    %v253 = vpop.f32.mrb[0].mxu0
    %v254 = vadd.f32 0.0, %v253
    %v255 = vpop.f32.mrb[0].mxu0
    %256 = vdwg.mxu0
    %257 = vrot.lane.b32.xlu0 %v131, 112
    %v258 = vpop.permute.xlu0 %257
    %259 = vrot.lane.b32.xlu0 %v131, 80
    %v260 = vpop.permute.xlu0 %259
    %v262 = vsel %vm135, %v258, 0
    %v265 = vsel %vm135, %v260, 0
    %267 = vmatprep.subr.bf16.mxu0 0
    %268 = vmatpush1.bf16.xpose.msra.mxu0 %v265
    %269 = vmatprep.subr.bf16.mxu0 0
    %270 = vmatpush1.bf16.xpose.msra.mxu0 0
    %271 = vmatprep.subr.bf16.mxu0 0
    %272 = vmatpush1.bf16.xpose.msra.mxu0 0
    %273 = vmatprep.subr.bf16.mxu0 0
    %274 = vmatpush1.bf16.xpose.msra.mxu0 0
    %275 = vmatprep.subr.bf16.mxu0 0
    %276 = vmatpush1.bf16.xpose.msra.mxu0 0
    %277 = vmatprep.subr.bf16.mxu0 0
    %278 = vmatpush1.bf16.xpose.msra.mxu0 0
    %279 = vmatprep.subr.bf16.mxu0 0
    %280 = vmatpush1.bf16.xpose.msra.mxu0 0
    %281 = vmatprep.subr.bf16.mxu0 0
    %282 = vmatpush1.bf16.xpose.msra.mxu0 0
    %283 = vmatprep.subr.bf16.mxu0 0
    %284 = vmatpush1.bf16.xpose.msra.mxu0 0
    %285 = vmatprep.subr.bf16.mxu0 0
    %286 = vmatpush1.bf16.xpose.msra.mxu0 0
    %287 = vmatprep.subr.bf16.mxu0 0
    %288 = vmatpush1.bf16.xpose.msra.mxu0 0
    %289 = vmatprep.subr.bf16.mxu0 0
    %290 = vmatpush1.bf16.xpose.msra.mxu0 0
    %291 = vmatprep.subr.bf16.mxu0 0
    %292 = vmatpush1.bf16.xpose.msra.mxu0 0
    %293 = vmatprep.subr.bf16.mxu0 0
    %294 = vmatpush1.bf16.xpose.msra.mxu0 0
    %295 = vmatprep.subr.bf16.mxu0 0
    %296 = vmatpush1.bf16.xpose.msra.mxu0 0
    %297 = vmatprep.subr.bf16.mxu0 0
    %298 = vmatpush1.bf16.xpose.msra.mxu0 0
    %299 = vmatprep.mubr.bf16.mxu0 0
    %300 = vmatmul.mubr.bf16.gmra.mrb[0].mxu0 %v262
    %v301 = vpop.f32.mrb[0].mxu0
    %v302 = vadd.f32 0.0, %v301
    %v303 = vpop.f32.mrb[0].mxu0
    %v304 = vpop.f32.mrb[0].mxu0
    %v305 = vadd.f32 0.0, %v304
    %v306 = vpop.f32.mrb[0].mxu0
    %307 = vdwg.mxu0
    %v308 = vmul.f32 %v302, 0.25
    %v309 = vmul.f32 %v305, 0.25
    %v310 = vadd.f32 %v308, %v19
    %v311 = vadd.f32 %v309, %v20
    %v312 = vsel %vm135, %v310, -inf
    %313 = vmax.xlane.f32.xlu0 %v312
    %v314 = vpop.xlane.xlu0 %313
    %v315 = vsel %vm135, %v311, -inf
    %316 = vmax.xlane.f32.xlu0 %v315
    %v317 = vpop.xlane.xlu0 %316
    %v318 = vsub.f32 %v310, %v314
    %v319 = vsub.f32 %v311, %v317
    %v320 = vmul.f32 %v318, 1.442695
    %v321 = vpow.pop %v320
    %v322 = vmul.f32 %v319, 1.442695
    %v323 = vpow.pop %v322
    %v324 = vsel %vm135, %v321, 0.0
    %325 = vadd.xlane.f32.xlu0 %v324
    %v326 = vpop.xlane.xlu0 %325
    %v327 = vsel %vm135, %v323, 0.0
    %328 = vadd.xlane.f32.xlu0 %v327
    %v329 = vpop.xlane.xlu0 %328
    %v330 = vrcp.pop %v326
    %v331 = vrcp.pop %v329
    %v332 = vmul.f32 %v321, %v330
    %v333 = vmul.f32 %v323, %v331
    %v334 = vpack.c.bf16 %v333, %v332
    %335 = vrot.lane.b32.xlu0 %v131, 48
    %v336 = vpop.permute.xlu0 %335
    %v339 = vsel %vm135, %v334, 0
    %341 = vmatprep.subr.bf16.mxu0 0
    %342 = vmatpush1.bf16.msra.mxu0 %v336
    %343 = vmatprep.subr.bf16.mxu0 0
    %344 = vmatpush1.bf16.msra.mxu0 0
    %345 = vmatprep.subr.bf16.mxu0 0
    %346 = vmatpush1.bf16.msra.mxu0 0
    %347 = vmatprep.subr.bf16.mxu0 0
    %348 = vmatpush1.bf16.msra.mxu0 0
    %349 = vmatprep.subr.bf16.mxu0 0
    %350 = vmatpush1.bf16.msra.mxu0 0
    %351 = vmatprep.subr.bf16.mxu0 0
    %352 = vmatpush1.bf16.msra.mxu0 0
    %353 = vmatprep.subr.bf16.mxu0 0
    %354 = vmatpush1.bf16.msra.mxu0 0
    %355 = vmatprep.subr.bf16.mxu0 0
    %356 = vmatpush1.bf16.msra.mxu0 0
    %357 = vmatprep.subr.bf16.mxu0 0
    %358 = vmatpush1.bf16.msra.mxu0 0
    %359 = vmatprep.subr.bf16.mxu0 0
    %360 = vmatpush1.bf16.msra.mxu0 0
    %361 = vmatprep.subr.bf16.mxu0 0
    %362 = vmatpush1.bf16.msra.mxu0 0
    %363 = vmatprep.subr.bf16.mxu0 0
    %364 = vmatpush1.bf16.msra.mxu0 0
    %365 = vmatprep.subr.bf16.mxu0 0
    %366 = vmatpush1.bf16.msra.mxu0 0
    %367 = vmatprep.subr.bf16.mxu0 0
    %368 = vmatpush1.bf16.msra.mxu0 0
    %369 = vmatprep.subr.bf16.mxu0 0
    %370 = vmatpush1.bf16.msra.mxu0 0
    %371 = vmatprep.subr.bf16.mxu0 0
    %372 = vmatpush1.bf16.msra.mxu0 0
    %373 = vmatprep.mubr.bf16.mxu0 0
    %374 = vmatmul.mubr.bf16.gmra.mrb[0].mxu0 %v339
    %v375 = vpop.f32.mrb[0].mxu0
    %v376 = vadd.f32 0.0, %v375
    %v377 = vpop.f32.mrb[0].mxu0
    %v378 = vpop.f32.mrb[0].mxu0
    %v379 = vadd.f32 0.0, %v378
    %v380 = vpop.f32.mrb[0].mxu0
    %381 = vdwg.mxu0
    %384 = vrot.lane.b32.xlu0 %v376, 16
    %v385 = vpop.permute.xlu0 %384
    %386 = vrot.lane.b32.xlu0 %v379, 16
    %v387 = vpop.permute.xlu0 %386
    %v390 = vsel %vm135, %v251, %v385
    %v391 = vsel %vm135, %v254, %v387
    %v392 = vpack.c.bf16 %v391, %v390
    %v393 = vld [vmem:[%s2 + $0x10] sm:$0xf]
    %v394 = vld [vmem:[%s2 + $0x14] sm:$0xf]
    %v395 = vld [vmem:[%s2 + $0x18] sm:$0xf]
    %v396 = vld [vmem:[%s2 + $0x1c] sm:$0xf]
    %v401 = vunpack.c.l.b16 %v393
    %v402 = vunpack.c.l.b16 %v394
    %v403 = vunpack.c.l.b16 %v395
    %v404 = vunpack.c.l.b16 %v396
    %v405 = vpack.c.b16 %v402, %v401
    %v406 = vpack.c.b16 %v404, %v403
    %v410 = vsel %vm25, %v392, 0
    %412 = vmatprep.subr.bf16.mxu0 0
    %413 = vmatpush1.bf16.msra.mxu0 %v405
    %414 = vmatprep.subr.bf16.mxu0 0
    %415 = vmatpush1.bf16.msra.mxu0 %v406
    %416 = vmatprep.subr.bf16.mxu0 0
    %417 = vmatpush1.bf16.msra.mxu0 0
    %418 = vmatprep.subr.bf16.mxu0 0
    %419 = vmatpush1.bf16.msra.mxu0 0
    %420 = vmatprep.subr.bf16.mxu0 0
    %421 = vmatpush1.bf16.msra.mxu0 0
    %422 = vmatprep.subr.bf16.mxu0 0
    %423 = vmatpush1.bf16.msra.mxu0 0
    %424 = vmatprep.subr.bf16.mxu0 0
    %425 = vmatpush1.bf16.msra.mxu0 0
    %426 = vmatprep.subr.bf16.mxu0 0
    %427 = vmatpush1.bf16.msra.mxu0 0
    %428 = vmatprep.subr.bf16.mxu0 0
    %429 = vmatpush1.bf16.msra.mxu0 0
    %430 = vmatprep.subr.bf16.mxu0 0
    %431 = vmatpush1.bf16.msra.mxu0 0
    %432 = vmatprep.subr.bf16.mxu0 0
    %433 = vmatpush1.bf16.msra.mxu0 0
    %434 = vmatprep.subr.bf16.mxu0 0
    %435 = vmatpush1.bf16.msra.mxu0 0
    %436 = vmatprep.subr.bf16.mxu0 0
    %437 = vmatpush1.bf16.msra.mxu0 0
    %438 = vmatprep.subr.bf16.mxu0 0
    %439 = vmatpush1.bf16.msra.mxu0 0
    %440 = vmatprep.subr.bf16.mxu0 0
    %441 = vmatpush1.bf16.msra.mxu0 0
    %442 = vmatprep.subr.bf16.mxu0 0
    %443 = vmatpush1.bf16.msra.mxu0 0
    %444 = vmatprep.mubr.bf16.mxu0 0
    %445 = vmatmul.mubr.bf16.gmra.mrb[0].mxu0 %v410
    %v446 = vpop.f32.mrb[0].mxu0
    %v447 = vadd.f32 0.0, %v446
    %v448 = vpop.f32.mrb[0].mxu0
    %v449 = vpop.f32.mrb[0].mxu0
    %v450 = vadd.f32 0.0, %v449
    %v451 = vpop.f32.mrb[0].mxu0
    %452 = vdwg.mxu0
    %v453 = vld [vmem:[%s3 + $0x3] sm:$0x1]
    %v454 = vlaneseq
    %v455 = vshrl.u32 %v454, 7
    %v456 = vsub.s32 0, %v455
    %v457 = vrot.slane %v453, %v456
    %v458 = vadd.f32 %v447, %v457
    %v459 = vadd.f32 %v450, %v457
    %v460 = vadd.f32 %v458, %v63
    %v461 = vadd.f32 %v459, %v64
    %v462 = vld [vmem:[%s3 + $0x4] sm:$0x1]
    %v463 = vld [vmem:[%s3 + $0x5] sm:$0x1]
    %v464 = vsel %vm25, %v460, 0.0
    %465 = vadd.xlane.f32.xlu0 %v464
    %v466 = vpop.xlane.xlu0 %465
    %v467 = vsel %vm25, %v461, 0.0
    %468 = vadd.xlane.f32.xlu0 %v467
    %v469 = vpop.xlane.xlu0 %468
    %v470 = vmul.f32 %v466, %v32
    %v471 = vmul.f32 %v469, %v32
    %v472 = vsub.f32 %v460, %v470
    %v473 = vsub.f32 %v461, %v471
    %v474 = vmul.f32 %v472, %v472
    %v475 = vmul.f32 %v473, %v473
    %v476 = vsel %vm25, %v474, 0.0
    %477 = vadd.xlane.f32.xlu0 %v476
    %v478 = vpop.xlane.xlu0 %477
    %v479 = vsel %vm25, %v475, 0.0
    %480 = vadd.xlane.f32.xlu0 %v479
    %v481 = vpop.xlane.xlu0 %480
    %v482 = vmul.f32 %v478, %v32
    %v483 = vmul.f32 %v481, %v32
    %v484 = vadd.f32 %v482, 1e-05
    %v485 = vadd.f32 %v483, 1e-05
    %v486 = vrsqrt.pop %v484
    %v487 = vrsqrt.pop %v485
    %v488 = vmul.f32 %v472, %v486
    %v489 = vmul.f32 %v473, %v487
    %v490 = vlaneseq
    %v491 = vshrl.u32 %v490, 7
    %v492 = vsub.s32 0, %v491
    %v493 = vrot.slane %v462, %v492
    %v494 = vmul.f32 %v488, %v493
    %v495 = vmul.f32 %v489, %v493
    %v496 = vlaneseq
    %v497 = vshrl.u32 %v496, 7
    %v498 = vsub.s32 0, %v497
    %v499 = vrot.slane %v463, %v498
    %v500 = vadd.f32 %v494, %v499
    %v501 = vadd.f32 %v495, %v499
    %v502 = vpack.c.bf16 %v501, %v500
    %v503 = vld [vmem:[%s2 + $0x20] sm:$0xf]
    %v504 = vld [vmem:[%s2 + $0x24] sm:$0xf]
    %v505 = vld [vmem:[%s2 + $0x28] sm:$0xf]
    %v506 = vld [vmem:[%s2 + $0x2c] sm:$0xf]
    %v511 = vunpack.c.l.b16 %v503
    %v512 = vunpack.c.l.b16 %v504
    %v513 = vunpack.c.l.b16 %v505
    %v514 = vunpack.c.l.b16 %v506
    %v515 = vpack.c.b16 %v512, %v511
    %v516 = vpack.c.b16 %v514, %v513
    %v520 = vsel %vm25, %v502, 0
    %522 = vmatprep.subr.bf16.mxu0 0
    %523 = vmatpush1.bf16.msra.mxu0 %v515
    %524 = vmatprep.subr.bf16.mxu0 0
    %525 = vmatpush1.bf16.msra.mxu0 %v516
    %526 = vmatprep.subr.bf16.mxu0 0
    %527 = vmatpush1.bf16.msra.mxu0 0
    %528 = vmatprep.subr.bf16.mxu0 0
    %529 = vmatpush1.bf16.msra.mxu0 0
    %530 = vmatprep.subr.bf16.mxu0 0
    %531 = vmatpush1.bf16.msra.mxu0 0
    %532 = vmatprep.subr.bf16.mxu0 0
    %533 = vmatpush1.bf16.msra.mxu0 0
    %534 = vmatprep.subr.bf16.mxu0 0
    %535 = vmatpush1.bf16.msra.mxu0 0
    %536 = vmatprep.subr.bf16.mxu0 0
    %537 = vmatpush1.bf16.msra.mxu0 0
    %538 = vmatprep.subr.bf16.mxu0 0
    %539 = vmatpush1.bf16.msra.mxu0 0
    %540 = vmatprep.subr.bf16.mxu0 0
    %541 = vmatpush1.bf16.msra.mxu0 0
    %542 = vmatprep.subr.bf16.mxu0 0
    %543 = vmatpush1.bf16.msra.mxu0 0
    %544 = vmatprep.subr.bf16.mxu0 0
    %545 = vmatpush1.bf16.msra.mxu0 0
    %546 = vmatprep.subr.bf16.mxu0 0
    %547 = vmatpush1.bf16.msra.mxu0 0
    %548 = vmatprep.subr.bf16.mxu0 0
    %549 = vmatpush1.bf16.msra.mxu0 0
    %550 = vmatprep.subr.bf16.mxu0 0
    %551 = vmatpush1.bf16.msra.mxu0 0
    %552 = vmatprep.subr.bf16.mxu0 0
    %553 = vmatpush1.bf16.msra.mxu0 0
    %554 = vmatprep.mubr.bf16.mxu0 0
    %555 = vmatmul.mubr.bf16.gmra.mrb[0].mxu0 %v520
    %v556 = vpop.f32.mrb[0].mxu0
    %v557 = vadd.f32 0.0, %v556
    %v558 = vpop.f32.mrb[0].mxu0
    %v559 = vpop.f32.mrb[0].mxu0
    %v560 = vadd.f32 0.0, %v559
    %v561 = vpop.f32.mrb[0].mxu0
    %562 = vdwg.mxu0
    %v563 = vld [vmem:[%s3 + $0x6] sm:$0x1]
    %v564 = vlaneseq
    %v565 = vshrl.u32 %v564, 7
    %v566 = vsub.s32 0, %v565
    %v567 = vrot.slane %v563, %v566
    %v568 = vadd.f32 %v557, %v567
    %v569 = vadd.f32 %v560, %v567
    %v570 = vmul.f32 %v568, 0.5
    %v571 = vmul.f32 %v569, 0.5
    %v572 = vmul.f32 %v568, 0.044715
    %v573 = vmul.f32 %v569, 0.044715
    %v574 = vmul.f32 %v572, %v568
    %v575 = vmul.f32 %v573, %v569
    %v576 = vmul.f32 %v574, %v568
    %v577 = vmul.f32 %v575, %v569
    %v578 = vadd.f32 %v568, %v576
    %v579 = vadd.f32 %v569, %v577
    %v580 = vmul.f32 %v578, 0.7978846
    %v581 = vmul.f32 %v579, 0.7978846
    %v582 = vtanh.pop %v580
    %v583 = vtanh.pop %v581
    %v584 = vadd.f32 %v582, 1.0
    %v585 = vadd.f32 %v583, 1.0
    %v586 = vmul.f32 %v570, %v584
    %v587 = vmul.f32 %v571, %v585
    %v588 = vpack.c.bf16 %v587, %v586
    %v589 = vld [vmem:[%s2 + $0x30] sm:$0xf]
    %v590 = vld [vmem:[%s2 + $0x34] sm:$0xf]
    %v591 = vld [vmem:[%s2 + $0x38] sm:$0xf]
    %v592 = vld [vmem:[%s2 + $0x3c] sm:$0xf]
    %v593 = vld [vmem:[%s2 + $0x40] sm:$0xf]
    %v594 = vld [vmem:[%s2 + $0x44] sm:$0xf]
    %v595 = vld [vmem:[%s2 + $0x48] sm:$0xf]
    %v596 = vld [vmem:[%s2 + $0x4c] sm:$0xf]
    %v605 = vunpack.c.l.b16 %v589
    %v606 = vunpack.c.l.b16 %v590
    %v607 = vunpack.c.l.b16 %v591
    %v608 = vunpack.c.l.b16 %v592
    %v609 = vunpack.c.l.b16 %v593
    %v610 = vunpack.c.l.b16 %v594
    %v611 = vunpack.c.l.b16 %v595
    %v612 = vunpack.c.l.b16 %v596
    %v613 = vpack.c.b16 %v606, %v605
    %v614 = vpack.c.b16 %v608, %v607
    %v615 = vpack.c.b16 %v610, %v609
    %v616 = vpack.c.b16 %v612, %v611
    %vm621 = vcmask 523264
    %v623 = vsel %vm621, %v588, 0
    %625 = vmatprep.subr.bf16.mxu0 0
    %626 = vmatpush1.bf16.msra.mxu0 %v613
    %627 = vmatprep.subr.bf16.mxu0 0
    %628 = vmatpush1.bf16.msra.mxu0 %v614
    %629 = vmatprep.subr.bf16.mxu0 0
    %630 = vmatpush1.bf16.msra.mxu0 %v615
    %631 = vmatprep.subr.bf16.mxu0 0
    %632 = vmatpush1.bf16.msra.mxu0 %v616
    %633 = vmatprep.subr.bf16.mxu0 0
    %634 = vmatpush1.bf16.msra.mxu0 0
    %635 = vmatprep.subr.bf16.mxu0 0
    %636 = vmatpush1.bf16.msra.mxu0 0
    %637 = vmatprep.subr.bf16.mxu0 0
    %638 = vmatpush1.bf16.msra.mxu0 0
    %639 = vmatprep.subr.bf16.mxu0 0
    %640 = vmatpush1.bf16.msra.mxu0 0
    %641 = vmatprep.subr.bf16.mxu0 0
    %642 = vmatpush1.bf16.msra.mxu0 0
    %643 = vmatprep.subr.bf16.mxu0 0
    %644 = vmatpush1.bf16.msra.mxu0 0
    %645 = vmatprep.subr.bf16.mxu0 0
    %646 = vmatpush1.bf16.msra.mxu0 0
    %647 = vmatprep.subr.bf16.mxu0 0
    %648 = vmatpush1.bf16.msra.mxu0 0
    %649 = vmatprep.subr.bf16.mxu0 0
    %650 = vmatpush1.bf16.msra.mxu0 0
    %651 = vmatprep.subr.bf16.mxu0 0
    %652 = vmatpush1.bf16.msra.mxu0 0
    %653 = vmatprep.subr.bf16.mxu0 0
    %654 = vmatpush1.bf16.msra.mxu0 0
    %655 = vmatprep.subr.bf16.mxu0 0
    %656 = vmatpush1.bf16.msra.mxu0 0
    %657 = vmatprep.mubr.bf16.mxu0 0
    %658 = vmatmul.mubr.bf16.gmra.mrb[0].mxu0 %v623
    %v659 = vpop.f32.mrb[0].mxu0
    %v660 = vadd.f32 0.0, %v659
    %v661 = vpop.f32.mrb[0].mxu0
    %v662 = vpop.f32.mrb[0].mxu0
    %v663 = vadd.f32 0.0, %v662
    %v664 = vpop.f32.mrb[0].mxu0
    %665 = vdwg.mxu0
    %v666 = vld [vmem:[%s3 + $0x7] sm:$0x1]
    %v667 = vlaneseq
    %v668 = vshrl.u32 %v667, 7
    %v669 = vsub.s32 0, %v668
    %v670 = vrot.slane %v666, %v669
    %v671 = vadd.f32 %v660, %v670
    %v672 = vadd.f32 %v663, %v670
    %v673 = vadd.f32 %v671, %v500
    %v674 = vadd.f32 %v672, %v501
    %v675 = vld [vmem:[%s3 + $0x8] sm:$0x1]
    %v676 = vld [vmem:[%s3 + $0x9] sm:$0x1]
    %v677 = vsel %vm25, %v673, 0.0
    %678 = vadd.xlane.f32.xlu0 %v677
    %v679 = vpop.xlane.xlu0 %678
    %v680 = vsel %vm25, %v674, 0.0
    %681 = vadd.xlane.f32.xlu0 %v680
    %v682 = vpop.xlane.xlu0 %681
    %v683 = vmul.f32 %v679, %v32
    %v684 = vmul.f32 %v682, %v32
    %v685 = vsub.f32 %v673, %v683
    %v686 = vsub.f32 %v674, %v684
    %v687 = vmul.f32 %v685, %v685
    %v688 = vmul.f32 %v686, %v686
    %v689 = vsel %vm25, %v687, 0.0
    %690 = vadd.xlane.f32.xlu0 %v689
    %v691 = vpop.xlane.xlu0 %690
    %v692 = vsel %vm25, %v688, 0.0
    %693 = vadd.xlane.f32.xlu0 %v692
    %v694 = vpop.xlane.xlu0 %693
    %v695 = vmul.f32 %v691, %v32
    %v696 = vmul.f32 %v694, %v32
    %v697 = vadd.f32 %v695, 1e-05
    %v698 = vadd.f32 %v696, 1e-05
    %v699 = vrsqrt.pop %v697
    %v700 = vrsqrt.pop %v698
    %v701 = vmul.f32 %v685, %v699
    %v702 = vmul.f32 %v686, %v700
    %v703 = vlaneseq
    %v704 = vshrl.u32 %v703, 7
    %v705 = vsub.s32 0, %v704
    %v706 = vrot.slane %v675, %v705
    %v707 = vmul.f32 %v701, %v706
    %v708 = vmul.f32 %v702, %v706
    %v709 = vlaneseq
    %v710 = vshrl.u32 %v709, 7
    %v711 = vsub.s32 0, %v710
    %v712 = vrot.slane %v676, %v711
    %v713 = vadd.f32 %v707, %v712
    %v714 = vadd.f32 %v708, %v712
    %v715 = vpack.c.bf16 %v714, %v713
    %v716 = vld [vmem:[%s2 + $0x50] sm:$0xf]
    %v717 = vld [vmem:[%s2 + $0x54] sm:$0xf]
    %v718 = vld [vmem:[%s2 + $0x58] sm:$0xf]
    %v719 = vld [vmem:[%s2 + $0x5c] sm:$0xf]
    %v720 = vld [vmem:[%s3 + $0xa] sm:$0x1]
    %v721 = vlaneseq
    %v722 = vshrl.u32 %v721, 7
    %v723 = vsub.s32 0, %v722
    %v724 = vrot.slane %v720, %v723
    %v729 = vunpack.c.l.b16 %v716
    %v730 = vunpack.c.l.b16 %v717
    %v731 = vunpack.c.l.b16 %v718
    %v732 = vunpack.c.l.b16 %v719
    %v733 = vpack.c.b16 %v730, %v729
    %v734 = vpack.c.b16 %v732, %v731
    %v738 = vsel %vm25, %v715, 0
    %740 = vmatprep.subr.bf16.mxu0 0
    %741 = vmatpush1.bf16.msra.mxu0 %v733
    %742 = vmatprep.subr.bf16.mxu0 0
    %743 = vmatpush1.bf16.msra.mxu0 %v734
    %744 = vmatprep.subr.bf16.mxu0 0
    %745 = vmatpush1.bf16.msra.mxu0 0
    %746 = vmatprep.subr.bf16.mxu0 0
    %747 = vmatpush1.bf16.msra.mxu0 0
    %748 = vmatprep.subr.bf16.mxu0 0
    %749 = vmatpush1.bf16.msra.mxu0 0
    %750 = vmatprep.subr.bf16.mxu0 0
    %751 = vmatpush1.bf16.msra.mxu0 0
    %752 = vmatprep.subr.bf16.mxu0 0
    %753 = vmatpush1.bf16.msra.mxu0 0
    %754 = vmatprep.subr.bf16.mxu0 0
    %755 = vmatpush1.bf16.msra.mxu0 0
    %756 = vmatprep.subr.bf16.mxu0 0
    %757 = vmatpush1.bf16.msra.mxu0 0
    %758 = vmatprep.subr.bf16.mxu0 0
    %759 = vmatpush1.bf16.msra.mxu0 0
    %760 = vmatprep.subr.bf16.mxu0 0
    %761 = vmatpush1.bf16.msra.mxu0 0
    %762 = vmatprep.subr.bf16.mxu0 0
    %763 = vmatpush1.bf16.msra.mxu0 0
    %764 = vmatprep.subr.bf16.mxu0 0
    %765 = vmatpush1.bf16.msra.mxu0 0
    %766 = vmatprep.subr.bf16.mxu0 0
    %767 = vmatpush1.bf16.msra.mxu0 0
    %768 = vmatprep.subr.bf16.mxu0 0
    %769 = vmatpush1.bf16.msra.mxu0 0
    %770 = vmatprep.subr.bf16.mxu0 0
    %771 = vmatpush1.bf16.msra.mxu0 0
    %772 = vmatprep.mubr.bf16.mxu0 0
    %773 = vmatmul.mubr.bf16.gmra.mrb[0].mxu0 %v738
    %v774 = vpop.f32.mrb[0].mxu0
    %v775 = vadd.f32 %v724, %v774
    %v776 = vpop.f32.mrb[0].mxu0
    %v777 = vpop.f32.mrb[0].mxu0
    %v778 = vadd.f32 %v724, %v777
    %v779 = vpop.f32.mrb[0].mxu0
    %780 = vdwg.mxu0
    %v781 = vpack.c.bf16 %v778, %v775
    %783 = vrot.lane.b32.xlu0 %v781, 96
    %v784 = vpop.permute.xlu0 %783
    %v786 = vsel %vm135, %v781, 0
    %v789 = vsel %vm135, %v784, 0
    %791 = vmatprep.subr.bf16.mxu0 0
    %792 = vmatpush1.bf16.xpose.msra.mxu0 %v789
    %793 = vmatprep.subr.bf16.mxu0 0
    %794 = vmatpush1.bf16.xpose.msra.mxu0 0
    %795 = vmatprep.subr.bf16.mxu0 0
    %796 = vmatpush1.bf16.xpose.msra.mxu0 0
    %797 = vmatprep.subr.bf16.mxu0 0
    %798 = vmatpush1.bf16.xpose.msra.mxu0 0
    %799 = vmatprep.subr.bf16.mxu0 0
    %800 = vmatpush1.bf16.xpose.msra.mxu0 0
    %801 = vmatprep.subr.bf16.mxu0 0
    %802 = vmatpush1.bf16.xpose.msra.mxu0 0
    %803 = vmatprep.subr.bf16.mxu0 0
    %804 = vmatpush1.bf16.xpose.msra.mxu0 0
    %805 = vmatprep.subr.bf16.mxu0 0
    %806 = vmatpush1.bf16.xpose.msra.mxu0 0
    %807 = vmatprep.subr.bf16.mxu0 0
    %808 = vmatpush1.bf16.xpose.msra.mxu0 0
    %809 = vmatprep.subr.bf16.mxu0 0
    %810 = vmatpush1.bf16.xpose.msra.mxu0 0
    %811 = vmatprep.subr.bf16.mxu0 0
    %812 = vmatpush1.bf16.xpose.msra.mxu0 0
    %813 = vmatprep.subr.bf16.mxu0 0
    %814 = vmatpush1.bf16.xpose.msra.mxu0 0
    %815 = vmatprep.subr.bf16.mxu0 0
    %816 = vmatpush1.bf16.xpose.msra.mxu0 0
    %817 = vmatprep.subr.bf16.mxu0 0
    %818 = vmatpush1.bf16.xpose.msra.mxu0 0
    %819 = vmatprep.subr.bf16.mxu0 0
    %820 = vmatpush1.bf16.xpose.msra.mxu0 0
    %821 = vmatprep.subr.bf16.mxu0 0
    %822 = vmatpush1.bf16.xpose.msra.mxu0 0
    %823 = vmatprep.mubr.bf16.mxu0 0
    %824 = vmatmul.mubr.bf16.gmra.mrb[0].mxu0 %v786
    %v825 = vpop.f32.mrb[0].mxu0
    %v826 = vadd.f32 0.0, %v825
    %v827 = vpop.f32.mrb[0].mxu0
    %v828 = vpop.f32.mrb[0].mxu0
    %v829 = vadd.f32 0.0, %v828
    %v830 = vpop.f32.mrb[0].mxu0
    %831 = vdwg.mxu0
    %v832 = vmul.f32 %v826, 0.25
    %v833 = vmul.f32 %v829, 0.25
    %v834 = vadd.f32 %v832, %v19
    %v835 = vadd.f32 %v833, %v20
    %v836 = vsel %vm135, %v834, -inf
    %837 = vmax.xlane.f32.xlu0 %v836
    %v838 = vpop.xlane.xlu0 %837
    %v839 = vsel %vm135, %v835, -inf
    %840 = vmax.xlane.f32.xlu0 %v839
    %v841 = vpop.xlane.xlu0 %840
    %v842 = vsub.f32 %v834, %v838
    %v843 = vsub.f32 %v835, %v841
    %v844 = vmul.f32 %v842, 1.442695
    %v845 = vpow.pop %v844
    %v846 = vmul.f32 %v843, 1.442695
    %v847 = vpow.pop %v846
    %v848 = vsel %vm135, %v845, 0.0
    %849 = vadd.xlane.f32.xlu0 %v848
    %v850 = vpop.xlane.xlu0 %849
    %v851 = vsel %vm135, %v847, 0.0
    %852 = vadd.xlane.f32.xlu0 %v851
    %v853 = vpop.xlane.xlu0 %852
    %v854 = vrcp.pop %v850
    %v855 = vrcp.pop %v853
    %v856 = vmul.f32 %v845, %v854
    %v857 = vmul.f32 %v847, %v855
    %v858 = vpack.c.bf16 %v857, %v856
    %859 = vrot.lane.b32.xlu0 %v781, 64
    %v860 = vpop.permute.xlu0 %859
    %v863 = vsel %vm135, %v858, 0
    %865 = vmatprep.subr.bf16.mxu0 0
    %866 = vmatpush1.bf16.msra.mxu0 %v860
    %867 = vmatprep.subr.bf16.mxu0 0
    %868 = vmatpush1.bf16.msra.mxu0 0
    %869 = vmatprep.subr.bf16.mxu0 0
    %870 = vmatpush1.bf16.msra.mxu0 0
    %871 = vmatprep.subr.bf16.mxu0 0
    %872 = vmatpush1.bf16.msra.mxu0 0
    %873 = vmatprep.subr.bf16.mxu0 0
    %874 = vmatpush1.bf16.msra.mxu0 0
    %875 = vmatprep.subr.bf16.mxu0 0
    %876 = vmatpush1.bf16.msra.mxu0 0
    %877 = vmatprep.subr.bf16.mxu0 0
    %878 = vmatpush1.bf16.msra.mxu0 0
    %879 = vmatprep.subr.bf16.mxu0 0
    %880 = vmatpush1.bf16.msra.mxu0 0
    %881 = vmatprep.subr.bf16.mxu0 0
    %882 = vmatpush1.bf16.msra.mxu0 0
    %883 = vmatprep.subr.bf16.mxu0 0
    %884 = vmatpush1.bf16.msra.mxu0 0
    %885 = vmatprep.subr.bf16.mxu0 0
    %886 = vmatpush1.bf16.msra.mxu0 0
    %887 = vmatprep.subr.bf16.mxu0 0
    %888 = vmatpush1.bf16.msra.mxu0 0
    %889 = vmatprep.subr.bf16.mxu0 0
    %890 = vmatpush1.bf16.msra.mxu0 0
    %891 = vmatprep.subr.bf16.mxu0 0
    %892 = vmatpush1.bf16.msra.mxu0 0
    %893 = vmatprep.subr.bf16.mxu0 0
    %894 = vmatpush1.bf16.msra.mxu0 0
    %895 = vmatprep.subr.bf16.mxu0 0
    %896 = vmatpush1.bf16.msra.mxu0 0
    %897 = vmatprep.mubr.bf16.mxu0 0
    %898 = vmatmul.mubr.bf16.gmra.mrb[0].mxu0 %v863
    %v899 = vpop.f32.mrb[0].mxu0
    %v900 = vadd.f32 0.0, %v899
    %v901 = vpop.f32.mrb[0].mxu0
    %v902 = vpop.f32.mrb[0].mxu0
    %v903 = vadd.f32 0.0, %v902
    %v904 = vpop.f32.mrb[0].mxu0
    %905 = vdwg.mxu0
    %906 = vrot.lane.b32.xlu0 %v781, 112
    %v907 = vpop.permute.xlu0 %906
    %908 = vrot.lane.b32.xlu0 %v781, 80
    %v909 = vpop.permute.xlu0 %908
    %v911 = vsel %vm135, %v907, 0
    %v914 = vsel %vm135, %v909, 0
    %916 = vmatprep.subr.bf16.mxu0 0
    %917 = vmatpush1.bf16.xpose.msra.mxu0 %v914
    %918 = vmatprep.subr.bf16.mxu0 0
    %919 = vmatpush1.bf16.xpose.msra.mxu0 0
    %920 = vmatprep.subr.bf16.mxu0 0
    %921 = vmatpush1.bf16.xpose.msra.mxu0 0
    %922 = vmatprep.subr.bf16.mxu0 0
    %923 = vmatpush1.bf16.xpose.msra.mxu0 0
    %924 = vmatprep.subr.bf16.mxu0 0
    %925 = vmatpush1.bf16.xpose.msra.mxu0 0
    %926 = vmatprep.subr.bf16.mxu0 0
    %927 = vmatpush1.bf16.xpose.msra.mxu0 0
    %928 = vmatprep.subr.bf16.mxu0 0
    %929 = vmatpush1.bf16.xpose.msra.mxu0 0
    %930 = vmatprep.subr.bf16.mxu0 0
    %931 = vmatpush1.bf16.xpose.msra.mxu0 0
    %932 = vmatprep.subr.bf16.mxu0 0
    %933 = vmatpush1.bf16.xpose.msra.mxu0 0
    %934 = vmatprep.subr.bf16.mxu0 0
    %935 = vmatpush1.bf16.xpose.msra.mxu0 0
    %936 = vmatprep.subr.bf16.mxu0 0
    %937 = vmatpush1.bf16.xpose.msra.mxu0 0
    %938 = vmatprep.subr.bf16.mxu0 0
    %939 = vmatpush1.bf16.xpose.msra.mxu0 0
    %940 = vmatprep.subr.bf16.mxu0 0
    %941 = vmatpush1.bf16.xpose.msra.mxu0 0
    %942 = vmatprep.subr.bf16.mxu0 0
    %943 = vmatpush1.bf16.xpose.msra.mxu0 0
    %944 = vmatprep.subr.bf16.mxu0 0
    %945 = vmatpush1.bf16.xpose.msra.mxu0 0
    %946 = vmatprep.subr.bf16.mxu0 0
    %947 = vmatpush1.bf16.xpose.msra.mxu0 0
    %948 = vmatprep.mubr.bf16.mxu0 0
    %949 = vmatmul.mubr.bf16.gmra.mrb[0].mxu0 %v911
    %v950 = vpop.f32.mrb[0].mxu0
    %v951 = vadd.f32 0.0, %v950
    %v952 = vpop.f32.mrb[0].mxu0
    %v953 = vpop.f32.mrb[0].mxu0
    %v954 = vadd.f32 0.0, %v953
    %v955 = vpop.f32.mrb[0].mxu0
    %956 = vdwg.mxu0
    %v957 = vmul.f32 %v951, 0.25
    %v958 = vmul.f32 %v954, 0.25
    %v959 = vadd.f32 %v957, %v19
    %v960 = vadd.f32 %v958, %v20
    %v961 = vsel %vm135, %v959, -inf
    %962 = vmax.xlane.f32.xlu0 %v961
    %v963 = vpop.xlane.xlu0 %962
    %v964 = vsel %vm135, %v960, -inf
    %965 = vmax.xlane.f32.xlu0 %v964
    %v966 = vpop.xlane.xlu0 %965
    %v967 = vsub.f32 %v959, %v963
    %v968 = vsub.f32 %v960, %v966
    %v969 = vmul.f32 %v967, 1.442695
    %v970 = vpow.pop %v969
    %v971 = vmul.f32 %v968, 1.442695
    %v972 = vpow.pop %v971
    %v973 = vsel %vm135, %v970, 0.0
    %974 = vadd.xlane.f32.xlu0 %v973
    %v975 = vpop.xlane.xlu0 %974
    %v976 = vsel %vm135, %v972, 0.0
    %977 = vadd.xlane.f32.xlu0 %v976
    %v978 = vpop.xlane.xlu0 %977
    %v979 = vrcp.pop %v975
    %v980 = vrcp.pop %v978
    %v981 = vmul.f32 %v970, %v979
    %v982 = vmul.f32 %v972, %v980
    %v983 = vpack.c.bf16 %v982, %v981
    %984 = vrot.lane.b32.xlu0 %v781, 48
    %v985 = vpop.permute.xlu0 %984
    %v988 = vsel %vm135, %v983, 0
    %990 = vmatprep.subr.bf16.mxu0 0
    %991 = vmatpush1.bf16.msra.mxu0 %v985
    %992 = vmatprep.subr.bf16.mxu0 0
    %993 = vmatpush1.bf16.msra.mxu0 0
    %994 = vmatprep.subr.bf16.mxu0 0
    %995 = vmatpush1.bf16.msra.mxu0 0
    %996 = vmatprep.subr.bf16.mxu0 0
    %997 = vmatpush1.bf16.msra.mxu0 0
    %998 = vmatprep.subr.bf16.mxu0 0
    %999 = vmatpush1.bf16.msra.mxu0 0
    %1000 = vmatprep.subr.bf16.mxu0 0
    %1001 = vmatpush1.bf16.msra.mxu0 0
    %1002 = vmatprep.subr.bf16.mxu0 0
    %1003 = vmatpush1.bf16.msra.mxu0 0
    %1004 = vmatprep.subr.bf16.mxu0 0
    %1005 = vmatpush1.bf16.msra.mxu0 0
    %1006 = vmatprep.subr.bf16.mxu0 0
    %1007 = vmatpush1.bf16.msra.mxu0 0
    %1008 = vmatprep.subr.bf16.mxu0 0
    %1009 = vmatpush1.bf16.msra.mxu0 0
    %1010 = vmatprep.subr.bf16.mxu0 0
    %1011 = vmatpush1.bf16.msra.mxu0 0
    %1012 = vmatprep.subr.bf16.mxu0 0
    %1013 = vmatpush1.bf16.msra.mxu0 0
    %1014 = vmatprep.subr.bf16.mxu0 0
    %1015 = vmatpush1.bf16.msra.mxu0 0
    %1016 = vmatprep.subr.bf16.mxu0 0
    %1017 = vmatpush1.bf16.msra.mxu0 0
    %1018 = vmatprep.subr.bf16.mxu0 0
    %1019 = vmatpush1.bf16.msra.mxu0 0
    %1020 = vmatprep.subr.bf16.mxu0 0
    %1021 = vmatpush1.bf16.msra.mxu0 0
    %1022 = vmatprep.mubr.bf16.mxu0 0
    %1023 = vmatmul.mubr.bf16.gmra.mrb[0].mxu0 %v988
    %v1024 = vpop.f32.mrb[0].mxu0
    %v1025 = vadd.f32 0.0, %v1024
    %v1026 = vpop.f32.mrb[0].mxu0
    %v1027 = vpop.f32.mrb[0].mxu0
    %v1028 = vadd.f32 0.0, %v1027
    %v1029 = vpop.f32.mrb[0].mxu0
    %1030 = vdwg.mxu0
    %1033 = vrot.lane.b32.xlu0 %v1025, 16
    %v1034 = vpop.permute.xlu0 %1033
    %1035 = vrot.lane.b32.xlu0 %v1028, 16
    %v1036 = vpop.permute.xlu0 %1035
    %v1039 = vsel %vm135, %v900, %v1034
    %v1040 = vsel %vm135, %v903, %v1036
    %v1041 = vpack.c.bf16 %v1040, %v1039
    %v1042 = vld [vmem:[%s2 + $0x60] sm:$0xf]
    %v1043 = vld [vmem:[%s2 + $0x64] sm:$0xf]
    %v1044 = vld [vmem:[%s2 + $0x68] sm:$0xf]
    %v1045 = vld [vmem:[%s2 + $0x6c] sm:$0xf]
    %v1050 = vunpack.c.l.b16 %v1042
    %v1051 = vunpack.c.l.b16 %v1043
    %v1052 = vunpack.c.l.b16 %v1044
    %v1053 = vunpack.c.l.b16 %v1045
    %v1054 = vpack.c.b16 %v1051, %v1050
    %v1055 = vpack.c.b16 %v1053, %v1052
    %v1059 = vsel %vm25, %v1041, 0
    %1061 = vmatprep.subr.bf16.mxu0 0
    %1062 = vmatpush1.bf16.msra.mxu0 %v1054
    %1063 = vmatprep.subr.bf16.mxu0 0
    %1064 = vmatpush1.bf16.msra.mxu0 %v1055
    %1065 = vmatprep.subr.bf16.mxu0 0
    %1066 = vmatpush1.bf16.msra.mxu0 0
    %1067 = vmatprep.subr.bf16.mxu0 0
    %1068 = vmatpush1.bf16.msra.mxu0 0
    %1069 = vmatprep.subr.bf16.mxu0 0
    %1070 = vmatpush1.bf16.msra.mxu0 0
    %1071 = vmatprep.subr.bf16.mxu0 0
    %1072 = vmatpush1.bf16.msra.mxu0 0
    %1073 = vmatprep.subr.bf16.mxu0 0
    %1074 = vmatpush1.bf16.msra.mxu0 0
    %1075 = vmatprep.subr.bf16.mxu0 0
    %1076 = vmatpush1.bf16.msra.mxu0 0
    %1077 = vmatprep.subr.bf16.mxu0 0
    %1078 = vmatpush1.bf16.msra.mxu0 0
    %1079 = vmatprep.subr.bf16.mxu0 0
    %1080 = vmatpush1.bf16.msra.mxu0 0
    %1081 = vmatprep.subr.bf16.mxu0 0
    %1082 = vmatpush1.bf16.msra.mxu0 0
    %1083 = vmatprep.subr.bf16.mxu0 0
    %1084 = vmatpush1.bf16.msra.mxu0 0
    %1085 = vmatprep.subr.bf16.mxu0 0
    %1086 = vmatpush1.bf16.msra.mxu0 0
    %1087 = vmatprep.subr.bf16.mxu0 0
    %1088 = vmatpush1.bf16.msra.mxu0 0
    %1089 = vmatprep.subr.bf16.mxu0 0
    %1090 = vmatpush1.bf16.msra.mxu0 0
    %1091 = vmatprep.subr.bf16.mxu0 0
    %1092 = vmatpush1.bf16.msra.mxu0 0
    %1093 = vmatprep.mubr.bf16.mxu0 0
    %1094 = vmatmul.mubr.bf16.gmra.mrb[0].mxu0 %v1059
    %v1095 = vpop.f32.mrb[0].mxu0
    %v1096 = vadd.f32 0.0, %v1095
    %v1097 = vpop.f32.mrb[0].mxu0
    %v1098 = vpop.f32.mrb[0].mxu0
    %v1099 = vadd.f32 0.0, %v1098
    %v1100 = vpop.f32.mrb[0].mxu0
    %1101 = vdwg.mxu0
    %v1102 = vld [vmem:[%s3 + $0xb] sm:$0x1]
    %v1103 = vlaneseq
    %v1104 = vshrl.u32 %v1103, 7
    %v1105 = vsub.s32 0, %v1104
    %v1106 = vrot.slane %v1102, %v1105
    %v1107 = vadd.f32 %v1096, %v1106
    %v1108 = vadd.f32 %v1099, %v1106
    %v1109 = vadd.f32 %v1107, %v713
    %v1110 = vadd.f32 %v1108, %v714
    %v1111 = vld [vmem:[%s3 + $0xc] sm:$0x1]
    %v1112 = vld [vmem:[%s3 + $0xd] sm:$0x1]
    %v1113 = vsel %vm25, %v1109, 0.0
    %1114 = vadd.xlane.f32.xlu0 %v1113
    %v1115 = vpop.xlane.xlu0 %1114
    %v1116 = vsel %vm25, %v1110, 0.0
    %1117 = vadd.xlane.f32.xlu0 %v1116
    %v1118 = vpop.xlane.xlu0 %1117
    %v1119 = vmul.f32 %v1115, %v32
    %v1120 = vmul.f32 %v1118, %v32
    %v1121 = vsub.f32 %v1109, %v1119
    %v1122 = vsub.f32 %v1110, %v1120
    %v1123 = vmul.f32 %v1121, %v1121
    %v1124 = vmul.f32 %v1122, %v1122
    %v1125 = vsel %vm25, %v1123, 0.0
    %1126 = vadd.xlane.f32.xlu0 %v1125
    %v1127 = vpop.xlane.xlu0 %1126
    %v1128 = vsel %vm25, %v1124, 0.0
    %1129 = vadd.xlane.f32.xlu0 %v1128
    %v1130 = vpop.xlane.xlu0 %1129
    %v1131 = vmul.f32 %v1127, %v32
    %v1132 = vmul.f32 %v1130, %v32
    %v1133 = vadd.f32 %v1131, 1e-05
    %v1134 = vadd.f32 %v1132, 1e-05
    %v1135 = vrsqrt.pop %v1133
    %v1136 = vrsqrt.pop %v1134
    %v1137 = vmul.f32 %v1121, %v1135
    %v1138 = vmul.f32 %v1122, %v1136
    %v1139 = vlaneseq
    %v1140 = vshrl.u32 %v1139, 7
    %v1141 = vsub.s32 0, %v1140
    %v1142 = vrot.slane %v1111, %v1141
    %v1143 = vmul.f32 %v1137, %v1142
    %v1144 = vmul.f32 %v1138, %v1142
    %v1145 = vlaneseq
    %v1146 = vshrl.u32 %v1145, 7
    %v1147 = vsub.s32 0, %v1146
    %v1148 = vrot.slane %v1112, %v1147
    %v1149 = vadd.f32 %v1143, %v1148
    %v1150 = vadd.f32 %v1144, %v1148
    %v1151 = vpack.c.bf16 %v1150, %v1149
    %v1152 = vld [vmem:[%s2 + $0x70] sm:$0xf]
    %v1153 = vld [vmem:[%s2 + $0x74] sm:$0xf]
    %v1154 = vld [vmem:[%s2 + $0x78] sm:$0xf]
    %v1155 = vld [vmem:[%s2 + $0x7c] sm:$0xf]
    %v1160 = vunpack.c.l.b16 %v1152
    %v1161 = vunpack.c.l.b16 %v1153
    %v1162 = vunpack.c.l.b16 %v1154
    %v1163 = vunpack.c.l.b16 %v1155
    %v1164 = vpack.c.b16 %v1161, %v1160
    %v1165 = vpack.c.b16 %v1163, %v1162
    %v1169 = vsel %vm25, %v1151, 0
    %1171 = vmatprep.subr.bf16.mxu0 0
    %1172 = vmatpush1.bf16.msra.mxu0 %v1164
    %1173 = vmatprep.subr.bf16.mxu0 0
    %1174 = vmatpush1.bf16.msra.mxu0 %v1165
    %1175 = vmatprep.subr.bf16.mxu0 0
    %1176 = vmatpush1.bf16.msra.mxu0 0
    %1177 = vmatprep.subr.bf16.mxu0 0
    %1178 = vmatpush1.bf16.msra.mxu0 0
    %1179 = vmatprep.subr.bf16.mxu0 0
    %1180 = vmatpush1.bf16.msra.mxu0 0
    %1181 = vmatprep.subr.bf16.mxu0 0
    %1182 = vmatpush1.bf16.msra.mxu0 0
    %1183 = vmatprep.subr.bf16.mxu0 0
    %1184 = vmatpush1.bf16.msra.mxu0 0
    %1185 = vmatprep.subr.bf16.mxu0 0
    %1186 = vmatpush1.bf16.msra.mxu0 0
    %1187 = vmatprep.subr.bf16.mxu0 0
    %1188 = vmatpush1.bf16.msra.mxu0 0
    %1189 = vmatprep.subr.bf16.mxu0 0
    %1190 = vmatpush1.bf16.msra.mxu0 0
    %1191 = vmatprep.subr.bf16.mxu0 0
    %1192 = vmatpush1.bf16.msra.mxu0 0
    %1193 = vmatprep.subr.bf16.mxu0 0
    %1194 = vmatpush1.bf16.msra.mxu0 0
    %1195 = vmatprep.subr.bf16.mxu0 0
    %1196 = vmatpush1.bf16.msra.mxu0 0
    %1197 = vmatprep.subr.bf16.mxu0 0
    %1198 = vmatpush1.bf16.msra.mxu0 0
    %1199 = vmatprep.subr.bf16.mxu0 0
    %1200 = vmatpush1.bf16.msra.mxu0 0
    %1201 = vmatprep.subr.bf16.mxu0 0
    %1202 = vmatpush1.bf16.msra.mxu0 0
    %1203 = vmatprep.mubr.bf16.mxu0 0
    %1204 = vmatmul.mubr.bf16.gmra.mrb[0].mxu0 %v1169
    %v1205 = vpop.f32.mrb[0].mxu0
    %v1206 = vadd.f32 0.0, %v1205
    %v1207 = vpop.f32.mrb[0].mxu0
    %v1208 = vpop.f32.mrb[0].mxu0
    %v1209 = vadd.f32 0.0, %v1208
    %v1210 = vpop.f32.mrb[0].mxu0
    %1211 = vdwg.mxu0
    %v1212 = vld [vmem:[%s3 + $0xe] sm:$0x1]
    %v1213 = vlaneseq
    %v1214 = vshrl.u32 %v1213, 7
    %v1215 = vsub.s32 0, %v1214
    %v1216 = vrot.slane %v1212, %v1215
    %v1217 = vadd.f32 %v1206, %v1216
    %v1218 = vadd.f32 %v1209, %v1216
    %v1219 = vmul.f32 %v1217, 0.5
    %v1220 = vmul.f32 %v1218, 0.5
    %v1221 = vmul.f32 %v1217, 0.044715
    %v1222 = vmul.f32 %v1218, 0.044715
    %v1223 = vmul.f32 %v1221, %v1217
    %v1224 = vmul.f32 %v1222, %v1218
    %v1225 = vmul.f32 %v1223, %v1217
    %v1226 = vmul.f32 %v1224, %v1218
    %v1227 = vadd.f32 %v1217, %v1225
    %v1228 = vadd.f32 %v1218, %v1226
    %v1229 = vmul.f32 %v1227, 0.7978846
    %v1230 = vmul.f32 %v1228, 0.7978846
    %v1231 = vtanh.pop %v1229
    %v1232 = vtanh.pop %v1230
    %v1233 = vadd.f32 %v1231, 1.0
    %v1234 = vadd.f32 %v1232, 1.0
    %v1235 = vmul.f32 %v1219, %v1233
    %v1236 = vmul.f32 %v1220, %v1234
    %v1237 = vpack.c.bf16 %v1236, %v1235
    %v1238 = vld [vmem:[%s2 + $0x80] sm:$0xf]
    %v1239 = vld [vmem:[%s2 + $0x84] sm:$0xf]
    %v1240 = vld [vmem:[%s2 + $0x88] sm:$0xf]
    %v1241 = vld [vmem:[%s2 + $0x8c] sm:$0xf]
    %v1242 = vld [vmem:[%s2 + $0x90] sm:$0xf]
    %v1243 = vld [vmem:[%s2 + $0x94] sm:$0xf]
    %v1244 = vld [vmem:[%s2 + $0x98] sm:$0xf]
    %v1245 = vld [vmem:[%s2 + $0x9c] sm:$0xf]
    %v1254 = vunpack.c.l.b16 %v1238
    %v1255 = vunpack.c.l.b16 %v1239
    %v1256 = vunpack.c.l.b16 %v1240
    %v1257 = vunpack.c.l.b16 %v1241
    %v1258 = vunpack.c.l.b16 %v1242
    %v1259 = vunpack.c.l.b16 %v1243
    %v1260 = vunpack.c.l.b16 %v1244
    %v1261 = vunpack.c.l.b16 %v1245
    %v1262 = vpack.c.b16 %v1255, %v1254
    %v1263 = vpack.c.b16 %v1257, %v1256
    %v1264 = vpack.c.b16 %v1259, %v1258
    %v1265 = vpack.c.b16 %v1261, %v1260
    %v1271 = vsel %vm621, %v1237, 0
    %1273 = vmatprep.subr.bf16.mxu0 0
    %1274 = vmatpush1.bf16.msra.mxu0 %v1262
    %1275 = vmatprep.subr.bf16.mxu0 0
    %1276 = vmatpush1.bf16.msra.mxu0 %v1263
    %1277 = vmatprep.subr.bf16.mxu0 0
    %1278 = vmatpush1.bf16.msra.mxu0 %v1264
    %1279 = vmatprep.subr.bf16.mxu0 0
    %1280 = vmatpush1.bf16.msra.mxu0 %v1265
    %1281 = vmatprep.subr.bf16.mxu0 0
    %1282 = vmatpush1.bf16.msra.mxu0 0
    %1283 = vmatprep.subr.bf16.mxu0 0
    %1284 = vmatpush1.bf16.msra.mxu0 0
    %1285 = vmatprep.subr.bf16.mxu0 0
    %1286 = vmatpush1.bf16.msra.mxu0 0
    %1287 = vmatprep.subr.bf16.mxu0 0
    %1288 = vmatpush1.bf16.msra.mxu0 0
    %1289 = vmatprep.subr.bf16.mxu0 0
    %1290 = vmatpush1.bf16.msra.mxu0 0
    %1291 = vmatprep.subr.bf16.mxu0 0
    %1292 = vmatpush1.bf16.msra.mxu0 0
    %1293 = vmatprep.subr.bf16.mxu0 0
    %1294 = vmatpush1.bf16.msra.mxu0 0
    %1295 = vmatprep.subr.bf16.mxu0 0
    %1296 = vmatpush1.bf16.msra.mxu0 0
    %1297 = vmatprep.subr.bf16.mxu0 0
    %1298 = vmatpush1.bf16.msra.mxu0 0
    %1299 = vmatprep.subr.bf16.mxu0 0
    %1300 = vmatpush1.bf16.msra.mxu0 0
    %1301 = vmatprep.subr.bf16.mxu0 0
    %1302 = vmatpush1.bf16.msra.mxu0 0
    %1303 = vmatprep.subr.bf16.mxu0 0
    %1304 = vmatpush1.bf16.msra.mxu0 0
    %1305 = vmatprep.mubr.bf16.mxu0 0
    %1306 = vmatmul.mubr.bf16.gmra.mrb[0].mxu0 %v1271
    %v1307 = vpop.f32.mrb[0].mxu0
    %v1308 = vadd.f32 0.0, %v1307
    %v1309 = vpop.f32.mrb[0].mxu0
    %v1310 = vpop.f32.mrb[0].mxu0
    %v1311 = vadd.f32 0.0, %v1310
    %v1312 = vpop.f32.mrb[0].mxu0
    %1313 = vdwg.mxu0
    %v1314 = vld [vmem:[%s3 + $0xf] sm:$0x1]
    %v1315 = vlaneseq
    %v1316 = vshrl.u32 %v1315, 7
    %v1317 = vsub.s32 0, %v1316
    %v1318 = vrot.slane %v1314, %v1317
    %v1319 = vadd.f32 %v1308, %v1318
    %v1320 = vadd.f32 %v1311, %v1318
    %v1321 = vadd.f32 %v1319, %v1149
    %v1322 = vadd.f32 %v1320, %v1150
    %v1323 = vld [vmem:[%s3 + $0x10] sm:$0x1]
    %v1324 = vld [vmem:[%s3 + $0x11] sm:$0x1]
    %v1325 = vsel %vm25, %v1321, 0.0
    %1326 = vadd.xlane.f32.xlu0 %v1325
    %v1327 = vpop.xlane.xlu0 %1326
    %v1328 = vsel %vm25, %v1322, 0.0
    %1329 = vadd.xlane.f32.xlu0 %v1328
    %v1330 = vpop.xlane.xlu0 %1329
    %v1331 = vmul.f32 %v1327, %v32
    %v1332 = vmul.f32 %v1330, %v32
    %v1333 = vsub.f32 %v1321, %v1331
    %v1334 = vsub.f32 %v1322, %v1332
    %v1335 = vmul.f32 %v1333, %v1333
    %v1336 = vmul.f32 %v1334, %v1334
    %v1337 = vsel %vm25, %v1335, 0.0
    %1338 = vadd.xlane.f32.xlu0 %v1337
    %v1339 = vpop.xlane.xlu0 %1338
    %v1340 = vsel %vm25, %v1336, 0.0
    %1341 = vadd.xlane.f32.xlu0 %v1340
    %v1342 = vpop.xlane.xlu0 %1341
    %v1343 = vmul.f32 %v1339, %v32
    %v1344 = vmul.f32 %v1342, %v32
    %v1345 = vadd.f32 %v1343, 1e-05
    %v1346 = vadd.f32 %v1344, 1e-05
    %v1347 = vrsqrt.pop %v1345
    %v1348 = vrsqrt.pop %v1346
    %v1349 = vmul.f32 %v1333, %v1347
    %v1350 = vmul.f32 %v1334, %v1348
    %v1351 = vlaneseq
    %v1352 = vshrl.u32 %v1351, 7
    %v1353 = vsub.s32 0, %v1352
    %v1354 = vrot.slane %v1323, %v1353
    %v1355 = vmul.f32 %v1349, %v1354
    %v1356 = vmul.f32 %v1350, %v1354
    %v1357 = vlaneseq
    %v1358 = vshrl.u32 %v1357, 7
    %v1359 = vsub.s32 0, %v1358
    %v1360 = vrot.slane %v1324, %v1359
    %v1361 = vadd.f32 %v1355, %v1360
    %v1362 = vadd.f32 %v1356, %v1360
    %v1363 = vpack.c.bf16 %v1362, %v1361
    %v1364 = vld [vmem:[%s2 + $0xa0] sm:$0xf]
    %v1365 = vld [vmem:[%s2 + $0xa4] sm:$0xf]
    %v1366 = vld [vmem:[%s2 + $0xa8] sm:$0xf]
    %v1367 = vld [vmem:[%s2 + $0xac] sm:$0xf]
    %v1372 = vunpack.c.l.b16 %v1364
    %v1373 = vunpack.c.l.b16 %v1365
    %v1374 = vunpack.c.l.b16 %v1366
    %v1375 = vunpack.c.l.b16 %v1367
    %v1376 = vpack.c.b16 %v1373, %v1372
    %v1377 = vpack.c.b16 %v1375, %v1374
    %v1381 = vsel %vm25, %v1363, 0
    %1383 = vmatprep.subr.bf16.mxu0 0
    %1384 = vmatpush1.bf16.msra.mxu0 %v1376
    %1385 = vmatprep.subr.bf16.mxu0 0
    %1386 = vmatpush1.bf16.msra.mxu0 %v1377
    %1387 = vmatprep.subr.bf16.mxu0 0
    %1388 = vmatpush1.bf16.msra.mxu0 0
    %1389 = vmatprep.subr.bf16.mxu0 0
    %1390 = vmatpush1.bf16.msra.mxu0 0
    %1391 = vmatprep.subr.bf16.mxu0 0
    %1392 = vmatpush1.bf16.msra.mxu0 0
    %1393 = vmatprep.subr.bf16.mxu0 0
    %1394 = vmatpush1.bf16.msra.mxu0 0
    %1395 = vmatprep.subr.bf16.mxu0 0
    %1396 = vmatpush1.bf16.msra.mxu0 0
    %1397 = vmatprep.subr.bf16.mxu0 0
    %1398 = vmatpush1.bf16.msra.mxu0 0
    %1399 = vmatprep.subr.bf16.mxu0 0
    %1400 = vmatpush1.bf16.msra.mxu0 0
    %1401 = vmatprep.subr.bf16.mxu0 0
    %1402 = vmatpush1.bf16.msra.mxu0 0
    %1403 = vmatprep.subr.bf16.mxu0 0
    %1404 = vmatpush1.bf16.msra.mxu0 0
    %1405 = vmatprep.subr.bf16.mxu0 0
    %1406 = vmatpush1.bf16.msra.mxu0 0
    %1407 = vmatprep.subr.bf16.mxu0 0
    %1408 = vmatpush1.bf16.msra.mxu0 0
    %1409 = vmatprep.subr.bf16.mxu0 0
    %1410 = vmatpush1.bf16.msra.mxu0 0
    %1411 = vmatprep.subr.bf16.mxu0 0
    %1412 = vmatpush1.bf16.msra.mxu0 0
    %1413 = vmatprep.subr.bf16.mxu0 0
    %1414 = vmatpush1.bf16.msra.mxu0 0
    %1415 = vmatprep.mubr.bf16.mxu0 0
    %1416 = vmatmul.mubr.bf16.gmra.mrb[0].mxu0 %v1381
    %v1417 = vpop.f32.mrb[0].mxu0
    %v1418 = vadd.f32 0.0, %v1417
    %v1419 = vpop.f32.mrb[0].mxu0
    %v1420 = vpop.f32.mrb[0].mxu0
    %v1421 = vadd.f32 0.0, %v1420
    %v1422 = vpop.f32.mrb[0].mxu0
    %1423 = vdwg.mxu0
    %v1424 = vld [vmem:[%s3 + $0x12] sm:$0x1]
    %v1425 = vlaneseq
    %v1426 = vshrl.u32 %v1425, 7
    %v1427 = vsub.s32 0, %v1426
    %v1428 = vrot.slane %v1424, %v1427
    %v1429 = vadd.f32 %v1418, %v1428
    %v1430 = vadd.f32 %v1421, %v1428
    %v1431 = vmul.f32 %v1429, 0.5
    %v1432 = vmul.f32 %v1430, 0.5
    %v1433 = vmul.f32 %v1429, 0.044715
    %v1434 = vmul.f32 %v1430, 0.044715
    %v1435 = vmul.f32 %v1433, %v1429
    %v1436 = vmul.f32 %v1434, %v1430
    %v1437 = vmul.f32 %v1435, %v1429
    %v1438 = vmul.f32 %v1436, %v1430
    %v1439 = vadd.f32 %v1429, %v1437
    %v1440 = vadd.f32 %v1430, %v1438
    %v1441 = vmul.f32 %v1439, 0.7978846
    %v1442 = vmul.f32 %v1440, 0.7978846
    %v1443 = vtanh.pop %v1441
    %v1444 = vtanh.pop %v1442
    %v1445 = vadd.f32 %v1443, 1.0
    %v1446 = vadd.f32 %v1444, 1.0
    %v1447 = vmul.f32 %v1431, %v1445
    %v1448 = vmul.f32 %v1432, %v1446
    %v1449 = vld [vmem:[%s3 + $0x13] sm:$0x1]
    %v1450 = vld [vmem:[%s3 + $0x14] sm:$0x1]
    %v1451 = vsel %vm25, %v1447, 0.0
    %1452 = vadd.xlane.f32.xlu0 %v1451
    %v1453 = vpop.xlane.xlu0 %1452
    %v1454 = vsel %vm25, %v1448, 0.0
    %1455 = vadd.xlane.f32.xlu0 %v1454
    %v1456 = vpop.xlane.xlu0 %1455
    %v1457 = vmul.f32 %v1453, %v32
    %v1458 = vmul.f32 %v1456, %v32
    %v1459 = vsub.f32 %v1447, %v1457
    %v1460 = vsub.f32 %v1448, %v1458
    %v1461 = vmul.f32 %v1459, %v1459
    %v1462 = vmul.f32 %v1460, %v1460
    %v1463 = vsel %vm25, %v1461, 0.0
    %1464 = vadd.xlane.f32.xlu0 %v1463
    %v1465 = vpop.xlane.xlu0 %1464
    %v1466 = vsel %vm25, %v1462, 0.0
    %1467 = vadd.xlane.f32.xlu0 %v1466
    %v1468 = vpop.xlane.xlu0 %1467
    %v1469 = vmul.f32 %v1465, %v32
    %v1470 = vmul.f32 %v1468, %v32
    %v1471 = vadd.f32 %v1469, 1e-05
    %v1472 = vadd.f32 %v1470, 1e-05
    %v1473 = vrsqrt.pop %v1471
    %v1474 = vrsqrt.pop %v1472
    %v1475 = vmul.f32 %v1459, %v1473
    %v1476 = vmul.f32 %v1460, %v1474
    %v1477 = vlaneseq
    %v1478 = vshrl.u32 %v1477, 7
    %v1479 = vsub.s32 0, %v1478
    %v1480 = vrot.slane %v1449, %v1479
    %v1481 = vmul.f32 %v1475, %v1480
    %v1482 = vmul.f32 %v1476, %v1480
    %v1483 = vlaneseq
    %v1484 = vshrl.u32 %v1483, 7
    %v1485 = vsub.s32 0, %v1484
    %v1486 = vrot.slane %v1450, %v1485
    %v1487 = vadd.f32 %v1481, %v1486
    %v1488 = vadd.f32 %v1482, %v1486
    %v1489 = vpack.c.bf16 %v1488, %v1487
    %v1490 = vld [vmem:[%s2 + $0xb0] sm:$0xf]
    %v1491 = vld [vmem:[%s2 + $0xb4] sm:$0xf]
    %v1492 = vld [vmem:[%s2 + $0xb8] sm:$0xf]
    %v1493 = vld [vmem:[%s2 + $0xbc] sm:$0xf]
    %v1494 = vld [vmem:[%s3 + $0x15] sm:$0x1]
    %v1495 = vlaneseq
    %v1496 = vshrl.u32 %v1495, 7
    %v1497 = vsub.s32 0, %v1496
    %v1498 = vrot.slane %v1494, %v1497
    %v1503 = vunpack.c.l.b16 %v1490
    %v1504 = vunpack.c.l.b16 %v1491
    %v1505 = vunpack.c.l.b16 %v1492
    %v1506 = vunpack.c.l.b16 %v1493
    %v1507 = vpack.c.b16 %v1504, %v1503
    %v1508 = vpack.c.b16 %v1506, %v1505
    %v1512 = vsel %vm25, %v1489, 0
    %1514 = vmatprep.subr.bf16.mxu0 0
    %1515 = vmatpush1.bf16.msra.mxu0 %v1507
    %1516 = vmatprep.subr.bf16.mxu0 0
    %1517 = vmatpush1.bf16.msra.mxu0 %v1508
    %1518 = vmatprep.subr.bf16.mxu0 0
    %1519 = vmatpush1.bf16.msra.mxu0 0
    %1520 = vmatprep.subr.bf16.mxu0 0
    %1521 = vmatpush1.bf16.msra.mxu0 0
    %1522 = vmatprep.subr.bf16.mxu0 0
    %1523 = vmatpush1.bf16.msra.mxu0 0
    %1524 = vmatprep.subr.bf16.mxu0 0
    %1525 = vmatpush1.bf16.msra.mxu0 0
    %1526 = vmatprep.subr.bf16.mxu0 0
    %1527 = vmatpush1.bf16.msra.mxu0 0
    %1528 = vmatprep.subr.bf16.mxu0 0
    %1529 = vmatpush1.bf16.msra.mxu0 0
    %1530 = vmatprep.subr.bf16.mxu0 0
    %1531 = vmatpush1.bf16.msra.mxu0 0
    %1532 = vmatprep.subr.bf16.mxu0 0
    %1533 = vmatpush1.bf16.msra.mxu0 0
    %1534 = vmatprep.subr.bf16.mxu0 0
    %1535 = vmatpush1.bf16.msra.mxu0 0
    %1536 = vmatprep.subr.bf16.mxu0 0
    %1537 = vmatpush1.bf16.msra.mxu0 0
    %1538 = vmatprep.subr.bf16.mxu0 0
    %1539 = vmatpush1.bf16.msra.mxu0 0
    %1540 = vmatprep.subr.bf16.mxu0 0
    %1541 = vmatpush1.bf16.msra.mxu0 0
    %1542 = vmatprep.subr.bf16.mxu0 0
    %1543 = vmatpush1.bf16.msra.mxu0 0
    %1544 = vmatprep.subr.bf16.mxu0 0
    %1545 = vmatpush1.bf16.msra.mxu0 0
    %1546 = vmatprep.mubr.bf16.mxu0 0
    %1547 = vmatmul.mubr.bf16.gmra.mrb[0].mxu0 %v1512
    %v1548 = vpop.f32.mrb[0].mxu0
    %v1549 = vadd.f32 %v1498, %v1548
    %v1550 = vpop.f32.mrb[0].mxu0
    %v1551 = vpop.f32.mrb[0].mxu0
    %v1552 = vadd.f32 %v1498, %v1551
    %v1553 = vpop.f32.mrb[0].mxu0
    %1554 = vdwg.mxu0
    %1555 = vst [vmem:[#allocation2] sm:$0xff] %v1549
    %1556 = vst [vmem:[#allocation2 + $0x8] sm:$0xff] %v1552
    // Predicated region
    $region18: #{fwd.1} parent=1 // pred_check
      _
    $region19: #{fwd.1} parent=1 // pred_check_branch
      %1558 = sbr.rel (0) target = $region21
    $region20: #{fwd.1} parent=1 // pred_region
      %s1560 = ssub.s32 256, 256
      %1561 = vsyncadd [#allocation3], %s1560
      %s1562 = sshll.u32 [#allocation2], 4
      %s1563 = int_to_ptr.vmem [resolvable:$true] %s1562
      %1568 = dma.vmem_to_hbm [thread:$0]  %s1563, 256, %s4, [#allocation3], 128, 128, 8
    $region21: #{fwd.1} parent=1 // pred_fallthru
      _
    // Predicated region
    $region22: #{fwd.1} parent=1 // pred_check
      _
    $region23: #{fwd.1} parent=1 // pred_check_branch
      %1570 = sbr.rel (0) target = $region25
    $region24: #{fwd.1} parent=1 // pred_region
      %1571 = dma.done [#allocation3], 256
    $region25: #{fwd.1} parent=1 // pred_fallthru
      _
    %1572 = vsyncpa [#allocation3], 1

</llo_original>
